<compile_context>
chip_gen: v7x
topology: tpu7x:2x2x1
jax: 0.10.0
libtpu: 0.0.40
codegen_flags: <defaults>
</compile_context>

<pallas_src>
from functools import partial

import jax
import jax.numpy as jnp
from jax import lax
from jax.experimental import pallas as pl
from jax.experimental.pallas import tpu as pltpu


# For output parity r (or s), the 3 conv taps collapse onto 2 source rows (cols).
# _TAP_GROUPS[(parity, tap)] = which 3x3 kernel indices land on that source tap.
_TAP_GROUPS = {(0, 0): (0,), (0, 1): (1, 2), (1, 0): (0, 1), (1, 1): (2,)}


def _phase_weights(weight_oihw):
    """(Cout, C, 3, 3) OIHW -> (4, 4C, Cout) folded per-phase weights (phase p = 2r+s)."""
    w = jnp.transpose(weight_oihw, (2, 3, 1, 0)).astype(jnp.float32)   # (3, 3, C, Cout)
    C, Cout = w.shape[2], w.shape[3]
    phases = []
    for r in range(2):
        for s in range(2):
            taps = []
            for ty in range(2):
                for tx in range(2):
                    wt = jnp.zeros((C, Cout), jnp.float32)
                    for ky in _TAP_GROUPS[(r, ty)]:
                        for kx in _TAP_GROUPS[(s, tx)]:
                            wt = wt + w[ky, kx]
                    taps.append(wt)                                    # tap order (ty,tx)
            phases.append(jnp.concatenate(taps, axis=0))               # (4C, Cout)
    return jnp.stack(phases, axis=0)                                   # (4, 4C, Cout)


def _vmem_limit_bytes():
    # 3/4 of physical VMEM: ~48 MiB on v7x (64 MiB parts), ~96 MiB on v5e/v6e (128 MiB).
    cap = 128 * 1024 * 1024
    try:
        cap = int(pltpu.get_tpu_info().vmem_capacity_bytes)
    except Exception:
        pass
    return int(min(cap * 3 // 4, 112 * 1024 * 1024))


def _pick_cout_tile(Cout, C, itemsize):
    """Lane-dense Cout tile (multiple of 128) so weights/output stay VMEM-bounded."""
    if Cout <= 256 or Cout % 128 != 0:
        return Cout
    for ct in (512, 256, 128):
        if Cout % ct == 0 and 16 * C * ct * itemsize <= 8 * 1024 * 1024:
            return ct
    return 128


def _pick_conv_h_tile(H, W, C, ct, n_ct, itemsize, budget):
    """Largest H tile whose double-buffered blocks + scratch fit the VMEM budget."""
    Wp = W + 2

    def fits(t):
        x_blk = 2 * t * Wp * C * itemsize            # input tile, double-buffered
        halo = 4 * Wp * C * itemsize                 # halo rows, double-buffered
        w_blk = (1 if n_ct == 1 else 2) * 16 * C * ct * itemsize
        out_blk = 2 * 4 * t * W * ct * itemsize      # 4-phase output, double-buffered
        xp = (t + 2) * Wp * C * itemsize             # padded-tile scratch
        tmp = t * W * max(4 * C * itemsize, 4 * ct)  # concat patch or f32 accumulator
        return x_blk + halo + w_blk + out_blk + xp + tmp <= budget

    cands = [t for t in range(1, min(H, 64) + 1)
             if H % t == 0 and ((t * W) % 8 == 0 or t == H)]
    good = [t for t in cands if fits(t)]
    if good:
        return max(good)
    return min(cands) if cands else H


def _pick_copy_h_tile(H, W, itemsize, budget):
    cands = [t for t in range(1, H + 1) if H % t == 0 and (t % 8 == 0 or t == H)]
    good = [t for t in cands if 10 * t * W * itemsize <= budget]
    return max(good) if good else min(cands)


def _resident_spec(block_shape, index_map, single_buffer):
    """BlockSpec; single-buffer large constant-index blocks (weights) to save VMEM."""
    if single_buffer:
        try:
            return pl.BlockSpec(block_shape, index_map, pipeline_mode=pl.Buffered(1))
        except Exception:
            pass
    return pl.BlockSpec(block_shape, index_map)


def _upsample_only_kernel(x_ref, o_ref):
    # x_ref: (1, tH, W)   o_ref: (1, 4, tH, W)   phase p = 2r+s (all phases equal x)
    x = x_ref[0]
    for p in range(4):
        o_ref[0, p] = x


def _upsample_conv_kernel(x_ref, halo_ref, w_ref, b_ref, o_ref, xp, *, fuse_taps):
    # x_ref   : (1, tH, W+2, C)     W-padded source rows of this tile
    # halo_ref: (1, 2, W+2, C)      row above / row below the tile (zero at image edges)
    # w_ref   : (4, 4C, Cout_t)     if fuse_taps else (4, 4, C, Cout_t)
    # b_ref   : (1, Cout_t)         f32
    # o_ref   : (1, 4, tH*W, Cout_t) per-phase outputs (p = 2r+s)
    # xp      : VMEM scratch (tH+2, W+2, C)
    _, tH, Wp, C = x_ref.shape
    W = Wp - 2

    # Assemble the padded tile with three contiguous row stores; only once per (n, i)
    # (the Cout grid axis is innermost, so the tile stays resident across it).
    @pl.when(pl.program_id(2) == 0)
    def _():
        xp[1:tH + 1] = x_ref[0]
        xp[0:1] = halo_ref[0, 0:1]
        xp[tH + 1:tH + 2] = halo_ref[0, 1:2]

    bias = b_ref[...]                                   # (1, Cout_t) f32

    for r in range(2):
        for s in range(2):
            p = 2 * r + s
            if fuse_taps:
                # Small C: fuse the 4 taps along K so the MXU sees K = 4C.
                patch = jnp.concatenate(
                    [xp[r + ty:r + ty + tH, s + tx:s + tx + W, :].reshape(tH * W, C)
                     for ty in range(2) for tx in range(2)], axis=1)        # (tH*W, 4C)
                y = jnp.dot(patch, w_ref[p], preferred_element_type=jnp.float32)
            else:
                # Large C: 4 accumulated dots, no lane-concat copies, taps sliced lazily.
                y = None
                for t, (ty, tx) in enumerate(((0, 0), (0, 1), (1, 0), (1, 1))):
                    tap = xp[r + ty:r + ty + tH, s + tx:s + tx + W, :].reshape(tH * W, C)
                    d = jnp.dot(tap, w_ref[p, t], preferred_element_type=jnp.float32)
                    y = d if y is None else y + d
            o_ref[0, p] = (y + bias).astype(o_ref.dtype)


def upsample_forward(x_nchw, *, use_conv, weight=None, bias=None, tile_h=None):
    """Forward pass of Upsample.

    x_nchw : (N, C, H, W) (PyTorch layout)
    weight : (Cout, C, 3, 3) if use_conv (PyTorch OIHW layout)
    bias   : (Cout,)         if use_conv
    returns (N, Cout_or_C, 2H, 2W)
    """
    N, C, H, W = x_nchw.shape
    dt = x_nchw.dtype
    isz = x_nchw.dtype.itemsize
    limit = _vmem_limit_bytes()
    budget = limit // 2

    if not use_conv:
        if tile_h and H % tile_h == 0 and (tile_h % 8 == 0 or tile_h == H):
            tH = tile_h
        else:
            tH = _pick_copy_h_tile(H, W, isz, budget)
        n_tiles = H // tH
        xf = x_nchw.reshape(N * C, H, W)                # stay NCHW; W on lanes
        out = pl.pallas_call(
            _upsample_only_kernel,
            out_shape=jax.ShapeDtypeStruct((N * C, 4, H, W), dt),
            grid_spec=pltpu.PrefetchScalarGridSpec(
                num_scalar_prefetch=0,
                grid=(N * C, n_tiles),
                in_specs=[pl.BlockSpec((1, tH, W), lambda m, i: (m, i, 0))],
                out_specs=pl.BlockSpec((1, 4, tH, W), lambda m, i: (m, 0, i, 0)),
            ),
            compiler_params=pltpu.CompilerParams(
                dimension_semantics=("parallel", "parallel"),
                vmem_limit_bytes=limit),
        )(xf)
        out = out.reshape(N, C, 2, 2, H, W)             # [n, c, r, s, i, j]
        out = jnp.transpose(out, (0, 1, 4, 2, 5, 3))    # [n, c, i, r, j, s]
        return out.reshape(N, C, 2 * H, 2 * W)

    Cout = weight.shape[0]
    x = jnp.transpose(x_nchw, (0, 2, 3, 1))             # NHWC: channels on lanes
    wp = _phase_weights(weight).astype(dt)              # (4, 4C, Cout), MXU input dtype
    b2d = bias.reshape(1, Cout).astype(jnp.float32)

    ct = _pick_cout_tile(Cout, C, isz)
    n_ct = Cout // ct
    fuse_taps = C < 128

    if tile_h and H % tile_h == 0 and ((tile_h * W) % 8 == 0 or tile_h == H):
        tH = tile_h
    else:
        tH = _pick_conv_h_tile(H, W, C, ct, n_ct, isz, budget)
    n_tiles = H // tH

    Wp = W + 2
    xw = jnp.pad(x, ((0, 0), (0, 0), (1, 1), (0, 0)))   # (N, H, W+2, C): W pad only

    # Halo rows straight from xw (no full-image H pad pass): row i*tH-1 above each
    # tile, row (i+1)*tH below it, zeros at the image edges.
    zero_row = jnp.zeros((N, 1, Wp, C), dt)
    if n_tiles > 1:
        top = jnp.concatenate([zero_row, xw[:, tH - 1:H - 1:tH]], axis=1)
        bot = jnp.concatenate([xw[:, tH:H:tH], zero_row], axis=1)
    else:
        top, bot = zero_row, zero_row
    halo = jnp.stack([top, bot], axis=2).reshape(N, 2 * n_tiles, Wp, C)

    # Single-buffer the resident weights only when their block is big enough to matter
    # and their index map is constant across the grid (n_ct == 1).
    w_block_bytes = 16 * C * ct * isz
    single_w = (n_ct == 1) and (w_block_bytes >= 4 * 1024 * 1024)
    if fuse_taps:
        w_arr = wp                                       # (4, 4C, Cout)
        w_spec = _resident_spec((4, 4 * C, ct), lambda n, i, j: (0, 0, j), single_w)
    else:
        w_arr = wp.reshape(4, 4, C, Cout)                # (4, 4, C, Cout)
        w_spec = _resident_spec((4, 4, C, ct), lambda n, i, j: (0, 0, 0, j), single_w)
    b_spec = pl.BlockSpec((1, ct), lambda n, i, j: (0, j))

    out = pl.pallas_call(
        partial(_upsample_conv_kernel, fuse_taps=fuse_taps),
        out_shape=jax.ShapeDtypeStruct((N, 4, H * W, Cout), dt),
        grid_spec=pltpu.PrefetchScalarGridSpec(
            num_scalar_prefetch=0,
            grid=(N, n_tiles, n_ct),                     # Cout innermost: x tile resident
            in_specs=[
                pl.BlockSpec((1, tH, Wp, C), lambda n, i, j: (n, i, 0, 0)),
                pl.BlockSpec((1, 2, Wp, C), lambda n, i, j: (n, i, 0, 0)),
                w_spec,
                b_spec,
            ],
            out_specs=pl.BlockSpec((1, 4, tH * W, ct), lambda n, i, j: (n, 0, i, j)),
            scratch_shapes=[pltpu.VMEM((tH + 2, Wp, C), dt)],
        ),
        compiler_params=pltpu.CompilerParams(
            dimension_semantics=("parallel", "parallel", "arbitrary"),
            vmem_limit_bytes=limit),
    )(xw, halo, w_arr, b2d)

    out = out.reshape(N, 2, 2, H, W, Cout)               # [n, r, s, i, j, c]
    out = jnp.transpose(out, (0, 5, 3, 1, 4, 2))          # [n, c, i, r, j, s]
    return out.reshape(N, Cout, 2 * H, 2 * W)


def _reference(x_nchw, use_conv, weight, bias):
    """Plain-JAX reference matching PyTorch semantics (for validation)."""
    up = jnp.repeat(jnp.repeat(x_nchw, 2, axis=2), 2, axis=3)
    if not use_conv:
        return up
    return lax.conv_general_dilated(
        up, weight, window_strides=(1, 1), padding=((1, 1), (1, 1)),
        dimension_numbers=("NCHW", "OIHW", "NCHW"),
    ) + bias.reshape(1, -1, 1, 1)


if __name__ == "__main__":
    key = jax.random.PRNGKey(0)
    k_x, k_w, k_b, k_x2, k_w2, k_b2 = jax.random.split(key, 6)

    # --- conv path, small channels (C < 128 -> lane-concat MXU path), tiled H + halo ---
    N, C, H, W, Cout = 2, 4, 16, 16, 8
    x = jax.random.normal(k_x, (N, C, H, W), dtype=jnp.float32)
    bound = 1.0 / (C * 9) ** 0.5
    weight = jax.random.uniform(k_w, (Cout, C, 3, 3), jnp.float32, -bound, bound)
    bias = jax.random.uniform(k_b, (Cout,), jnp.float32, -bound, bound)

    y = jax.block_until_ready(
        upsample_forward(x, use_conv=True, weight=weight, bias=bias, tile_h=8))
    y_ref = _reference(x, True, weight, bias)
    assert y.shape == (N, Cout, 2 * H, 2 * W)
    assert jnp.allclose(y, y_ref, atol=1e-4, rtol=1e-4)

    # --- conv path, wide channels (C >= 128 -> accumulated per-tap dots path) ---
    N2, C2, H2, W2, Cout2 = 1, 128, 8, 8, 128
    x2 = jax.random.normal(k_x2, (N2, C2, H2, W2), dtype=jnp.float32)
    b2 = 1.0 / (C2 * 9) ** 0.5
    w2 = jax.random.uniform(k_w2, (Cout2, C2, 3, 3), jnp.float32, -b2, b2)
    bb2 = jax.random.uniform(k_b2, (Cout2,), jnp.float32, -b2, b2)
    y2 = jax.block_until_ready(upsample_forward(x2, use_conv=True, weight=w2, bias=bb2))
    assert y2.shape == (N2, Cout2, 2 * H2, 2 * W2)
    assert jnp.allclose(y2, _reference(x2, True, w2, bb2), atol=1e-3, rtol=1e-3)

    # --- upsample-only path ---
    y3 = jax.block_until_ready(upsample_forward(x, use_conv=False, tile_h=8))
    assert y3.shape == (N, C, 2 * H, 2 * W)
    assert jnp.allclose(y3, _reference(x, False, None, None))

    print("KERNEL_OK")
</pallas_src>

<mosaic_0001>
module attributes {stable_mosaic.version = 11 : i64} {
  func.func @_upsample_conv_kernel(%arg0: i32, %arg1: i32, %arg2: i32, %arg3: memref<1x8x18x4xf32, #tpu.memory_space<vmem>>, %arg4: memref<1x2x18x4xf32, #tpu.memory_space<vmem>>, %arg5: memref<4x16x8xf32, #tpu.memory_space<vmem>>, %arg6: memref<1x8xf32, #tpu.memory_space<vmem>>, %arg7: memref<1x4x128x8xf32, #tpu.memory_space<vmem>>, %arg8: memref<10x18x4xf32, #tpu.memory_space<vmem>>) attributes {dimension_semantics = [#tpu.dimension_semantics<parallel>, #tpu.dimension_semantics<parallel>, #tpu.dimension_semantics<arbitrary>], iteration_bounds = array<i64: 2, 2, 1>, scalar_prefetch = 0 : i64, scratch_operands = 1 : i64, tpu.core_type = #tpu.core_type<tc>, window_params = [{transform_indices = @transform_0, window_bounds = array<i64: 1, 8, 18, 4>}, {transform_indices = @transform_1, window_bounds = array<i64: 1, 2, 18, 4>}, {transform_indices = @transform_2, window_bounds = array<i64: 4, 16, 8>}, {transform_indices = @transform_3, window_bounds = array<i64: 1, 8>}, {transform_indices = @transform_4, window_bounds = array<i64: 1, 4, 128, 8>}]} {
    %c0_i32 = arith.constant 0 : i32
    %0 = arith.cmpi eq, %arg2, %c0_i32 : i32
    %1 = arith.extui %0 : i1 to i32
    %c0_i32_0 = arith.constant 0 : i32
    %2 = arith.cmpi ne, %1, %c0_i32_0 : i32
    scf.if %2 {
      %c0_78 = arith.constant 0 : index
      %c0_79 = arith.constant 0 : index
      %c0_80 = arith.constant 0 : index
      %c0_81 = arith.constant 0 : index
      %72 = vector.load %arg3[%c0_78, %c0_79, %c0_80, %c0_81] : memref<1x8x18x4xf32, #tpu.memory_space<vmem>>, vector<1x8x18x4xf32>
      %73 = vector.shape_cast %72 : vector<1x8x18x4xf32> to vector<8x18x4xf32>
      %c1_82 = arith.constant 1 : index
      %c0_83 = arith.constant 0 : index
      %c0_84 = arith.constant 0 : index
      %74 = vector.load %arg8[%c1_82, %c0_83, %c0_84] : memref<10x18x4xf32, #tpu.memory_space<vmem>>, vector<8x18x4xf32>
      tpu.vector_store %arg8[%c1_82, %c0_83, %c0_84], %73 {strides = array<i32>} : memref<10x18x4xf32, #tpu.memory_space<vmem>>, vector<8x18x4xf32>,
      %c0_85 = arith.constant 0 : index
      %c0_86 = arith.constant 0 : index
      %c0_87 = arith.constant 0 : index
      %c0_88 = arith.constant 0 : index
      %75 = vector.load %arg4[%c0_85, %c0_86, %c0_87, %c0_88] : memref<1x2x18x4xf32, #tpu.memory_space<vmem>>, vector<1x1x18x4xf32>
      %76 = vector.shape_cast %75 : vector<1x1x18x4xf32> to vector<1x18x4xf32>
      %c0_89 = arith.constant 0 : index
      %c0_90 = arith.constant 0 : index
      %c0_91 = arith.constant 0 : index
      %77 = vector.load %arg8[%c0_89, %c0_90, %c0_91] : memref<10x18x4xf32, #tpu.memory_space<vmem>>, vector<1x18x4xf32>
      tpu.vector_store %arg8[%c0_89, %c0_90, %c0_91], %76 {strides = array<i32>} : memref<10x18x4xf32, #tpu.memory_space<vmem>>, vector<1x18x4xf32>,
      %c0_92 = arith.constant 0 : index
      %c1_93 = arith.constant 1 : index
      %c0_94 = arith.constant 0 : index
      %c0_95 = arith.constant 0 : index
      %78 = vector.load %arg4[%c0_92, %c1_93, %c0_94, %c0_95] : memref<1x2x18x4xf32, #tpu.memory_space<vmem>>, vector<1x1x18x4xf32>
      %79 = vector.shape_cast %78 : vector<1x1x18x4xf32> to vector<1x18x4xf32>
      %c9 = arith.constant 9 : index
      %c0_96 = arith.constant 0 : index
      %c0_97 = arith.constant 0 : index
      %80 = vector.load %arg8[%c9, %c0_96, %c0_97] : memref<10x18x4xf32, #tpu.memory_space<vmem>>, vector<1x18x4xf32>
      tpu.vector_store %arg8[%c9, %c0_96, %c0_97], %79 {strides = array<i32>} : memref<10x18x4xf32, #tpu.memory_space<vmem>>, vector<1x18x4xf32>,
    } else {
    }
    %c0 = arith.constant 0 : index
    %c0_1 = arith.constant 0 : index
    %3 = vector.load %arg6[%c0, %c0_1] : memref<1x8xf32, #tpu.memory_space<vmem>>, vector<1x8xf32>
    %c0_2 = arith.constant 0 : index
    %c0_3 = arith.constant 0 : index
    %c0_4 = arith.constant 0 : index
    %4 = vector.load %arg8[%c0_2, %c0_3, %c0_4] : memref<10x18x4xf32, #tpu.memory_space<vmem>>, vector<8x16x4xf32>
    %5 = vector.shape_cast %4 : vector<8x16x4xf32> to vector<128x4xf32>
    %c0_5 = arith.constant 0 : index
    %c1 = arith.constant 1 : index
    %c0_6 = arith.constant 0 : index
    %6 = vector.load %arg8[%c0_5, %c1, %c0_6] : memref<10x18x4xf32, #tpu.memory_space<vmem>>, vector<8x16x4xf32>
    %7 = vector.shape_cast %6 : vector<8x16x4xf32> to vector<128x4xf32>
    %c1_7 = arith.constant 1 : index
    %c0_8 = arith.constant 0 : index
    %c0_9 = arith.constant 0 : index
    %8 = vector.load %arg8[%c1_7, %c0_8, %c0_9] : memref<10x18x4xf32, #tpu.memory_space<vmem>>, vector<8x16x4xf32>
    %9 = vector.shape_cast %8 : vector<8x16x4xf32> to vector<128x4xf32>
    %c1_10 = arith.constant 1 : index
    %c1_11 = arith.constant 1 : index
    %c0_12 = arith.constant 0 : index
    %10 = vector.load %arg8[%c1_10, %c1_11, %c0_12] : memref<10x18x4xf32, #tpu.memory_space<vmem>>, vector<8x16x4xf32>
    %11 = vector.shape_cast %10 : vector<8x16x4xf32> to vector<128x4xf32>
    %12 = tpu.concatenate %5, %7, %9, %11 in 1 : vector<128x4xf32>, vector<128x4xf32>, vector<128x4xf32>, vector<128x4xf32> -> vector<128x16xf32>
    %c0_13 = arith.constant 0 : index
    %c0_14 = arith.constant 0 : index
    %c0_15 = arith.constant 0 : index
    %13 = vector.load %arg5[%c0_13, %c0_14, %c0_15] : memref<4x16x8xf32, #tpu.memory_space<vmem>>, vector<1x16x8xf32>
    %14 = vector.shape_cast %13 : vector<1x16x8xf32> to vector<16x8xf32>
    %cst = arith.constant dense<0.000000e+00> : vector<128x8xf32>
    %15 = tpu.matmul %12, %14, %cst {dimension_numbers = #tpu.dot_dimension_numbers<[1], [0], [0], [1], [0, 0, 1, 1], [], []>} : vector<128x16xf32>, vector<16x8xf32>, vector<128x8xf32> -> vector<128x8xf32>
    %16 = vector.broadcast %3 : vector<1x8xf32> to vector<128x8xf32>
    %17 = arith.addf %15, %16 : vector<128x8xf32>
    %c0_16 = arith.constant 0 : index
    %c0_17 = arith.constant 0 : index
    %c0_18 = arith.constant 0 : index
    %c0_19 = arith.constant 0 : index
    %18 = vector.load %arg7[%c0_16, %c0_17, %c0_18, %c0_19] : memref<1x4x128x8xf32, #tpu.memory_space<vmem>>, vector<1x1x128x8xf32>
    %19 = vector.shape_cast %18 : vector<1x1x128x8xf32> to vector<128x8xf32>
    %20 = vector.shape_cast %17 : vector<128x8xf32> to vector<1x1x128x8xf32>
    tpu.vector_store %arg7[%c0_16, %c0_17, %c0_18, %c0_19], %20 {strides = array<i32>} : memref<1x4x128x8xf32, #tpu.memory_space<vmem>>, vector<1x1x128x8xf32>,
    %c0_20 = arith.constant 0 : index
    %c1_21 = arith.constant 1 : index
    %c0_22 = arith.constant 0 : index
    %21 = vector.load %arg8[%c0_20, %c1_21, %c0_22] : memref<10x18x4xf32, #tpu.memory_space<vmem>>, vector<8x16x4xf32>
    %22 = vector.shape_cast %21 : vector<8x16x4xf32> to vector<128x4xf32>
    %c0_23 = arith.constant 0 : index
    %c2 = arith.constant 2 : index
    %c0_24 = arith.constant 0 : index
    %23 = vector.load %arg8[%c0_23, %c2, %c0_24] : memref<10x18x4xf32, #tpu.memory_space<vmem>>, vector<8x16x4xf32>
    %24 = vector.shape_cast %23 : vector<8x16x4xf32> to vector<128x4xf32>
    %c1_25 = arith.constant 1 : index
    %c1_26 = arith.constant 1 : index
    %c0_27 = arith.constant 0 : index
    %25 = vector.load %arg8[%c1_25, %c1_26, %c0_27] : memref<10x18x4xf32, #tpu.memory_space<vmem>>, vector<8x16x4xf32>
    %26 = vector.shape_cast %25 : vector<8x16x4xf32> to vector<128x4xf32>
    %c1_28 = arith.constant 1 : index
    %c2_29 = arith.constant 2 : index
    %c0_30 = arith.constant 0 : index
    %27 = vector.load %arg8[%c1_28, %c2_29, %c0_30] : memref<10x18x4xf32, #tpu.memory_space<vmem>>, vector<8x16x4xf32>
    %28 = vector.shape_cast %27 : vector<8x16x4xf32> to vector<128x4xf32>
    %29 = tpu.concatenate %22, %24, %26, %28 in 1 : vector<128x4xf32>, vector<128x4xf32>, vector<128x4xf32>, vector<128x4xf32> -> vector<128x16xf32>
    %c1_31 = arith.constant 1 : index
    %c0_32 = arith.constant 0 : index
    %c0_33 = arith.constant 0 : index
    %30 = vector.load %arg5[%c1_31, %c0_32, %c0_33] : memref<4x16x8xf32, #tpu.memory_space<vmem>>, vector<1x16x8xf32>
    %31 = vector.shape_cast %30 : vector<1x16x8xf32> to vector<16x8xf32>
    %cst_34 = arith.constant dense<0.000000e+00> : vector<128x8xf32>
    %32 = tpu.matmul %29, %31, %cst_34 {dimension_numbers = #tpu.dot_dimension_numbers<[1], [0], [0], [1], [0, 0, 1, 1], [], []>} : vector<128x16xf32>, vector<16x8xf32>, vector<128x8xf32> -> vector<128x8xf32>
    %33 = vector.broadcast %3 : vector<1x8xf32> to vector<128x8xf32>
    %34 = arith.addf %32, %33 : vector<128x8xf32>
    %c0_35 = arith.constant 0 : index
    %c1_36 = arith.constant 1 : index
    %c0_37 = arith.constant 0 : index
    %c0_38 = arith.constant 0 : index
    %35 = vector.load %arg7[%c0_35, %c1_36, %c0_37, %c0_38] : memref<1x4x128x8xf32, #tpu.memory_space<vmem>>, vector<1x1x128x8xf32>
    %36 = vector.shape_cast %35 : vector<1x1x128x8xf32> to vector<128x8xf32>
    %37 = vector.shape_cast %34 : vector<128x8xf32> to vector<1x1x128x8xf32>
    tpu.vector_store %arg7[%c0_35, %c1_36, %c0_37, %c0_38], %37 {strides = array<i32>} : memref<1x4x128x8xf32, #tpu.memory_space<vmem>>, vector<1x1x128x8xf32>,
    %c1_39 = arith.constant 1 : index
    %c0_40 = arith.constant 0 : index
    %c0_41 = arith.constant 0 : index
    %38 = vector.load %arg8[%c1_39, %c0_40, %c0_41] : memref<10x18x4xf32, #tpu.memory_space<vmem>>, vector<8x16x4xf32>
    %39 = vector.shape_cast %38 : vector<8x16x4xf32> to vector<128x4xf32>
    %c1_42 = arith.constant 1 : index
    %c1_43 = arith.constant 1 : index
    %c0_44 = arith.constant 0 : index
    %40 = vector.load %arg8[%c1_42, %c1_43, %c0_44] : memref<10x18x4xf32, #tpu.memory_space<vmem>>, vector<8x16x4xf32>
    %41 = vector.shape_cast %40 : vector<8x16x4xf32> to vector<128x4xf32>
    %c2_45 = arith.constant 2 : index
    %c0_46 = arith.constant 0 : index
    %c0_47 = arith.constant 0 : index
    %42 = vector.load %arg8[%c2_45, %c0_46, %c0_47] : memref<10x18x4xf32, #tpu.memory_space<vmem>>, vector<8x16x4xf32>
    %43 = vector.shape_cast %42 : vector<8x16x4xf32> to vector<128x4xf32>
    %c2_48 = arith.constant 2 : index
    %c1_49 = arith.constant 1 : index
    %c0_50 = arith.constant 0 : index
    %44 = vector.load %arg8[%c2_48, %c1_49, %c0_50] : memref<10x18x4xf32, #tpu.memory_space<vmem>>, vector<8x16x4xf32>
    %45 = vector.shape_cast %44 : vector<8x16x4xf32> to vector<128x4xf32>
    %46 = tpu.concatenate %39, %41, %43, %45 in 1 : vector<128x4xf32>, vector<128x4xf32>, vector<128x4xf32>, vector<128x4xf32> -> vector<128x16xf32>
    %c2_51 = arith.constant 2 : index
    %c0_52 = arith.constant 0 : index
    %c0_53 = arith.constant 0 : index
    %47 = vector.load %arg5[%c2_51, %c0_52, %c0_53] : memref<4x16x8xf32, #tpu.memory_space<vmem>>, vector<1x16x8xf32>
    %48 = vector.shape_cast %47 : vector<1x16x8xf32> to vector<16x8xf32>
    %cst_54 = arith.constant dense<0.000000e+00> : vector<128x8xf32>
    %49 = tpu.matmul %46, %48, %cst_54 {dimension_numbers = #tpu.dot_dimension_numbers<[1], [0], [0], [1], [0, 0, 1, 1], [], []>} : vector<128x16xf32>, vector<16x8xf32>, vector<128x8xf32> -> vector<128x8xf32>
    %50 = vector.broadcast %3 : vector<1x8xf32> to vector<128x8xf32>
    %51 = arith.addf %49, %50 : vector<128x8xf32>
    %c0_55 = arith.constant 0 : index
    %c2_56 = arith.constant 2 : index
    %c0_57 = arith.constant 0 : index
    %c0_58 = arith.constant 0 : index
    %52 = vector.load %arg7[%c0_55, %c2_56, %c0_57, %c0_58] : memref<1x4x128x8xf32, #tpu.memory_space<vmem>>, vector<1x1x128x8xf32>
    %53 = vector.shape_cast %52 : vector<1x1x128x8xf32> to vector<128x8xf32>
    %54 = vector.shape_cast %51 : vector<128x8xf32> to vector<1x1x128x8xf32>
    tpu.vector_store %arg7[%c0_55, %c2_56, %c0_57, %c0_58], %54 {strides = array<i32>} : memref<1x4x128x8xf32, #tpu.memory_space<vmem>>, vector<1x1x128x8xf32>,
    %c1_59 = arith.constant 1 : index
    %c1_60 = arith.constant 1 : index
    %c0_61 = arith.constant 0 : index
    %55 = vector.load %arg8[%c1_59, %c1_60, %c0_61] : memref<10x18x4xf32, #tpu.memory_space<vmem>>, vector<8x16x4xf32>
    %56 = vector.shape_cast %55 : vector<8x16x4xf32> to vector<128x4xf32>
    %c1_62 = arith.constant 1 : index
    %c2_63 = arith.constant 2 : index
    %c0_64 = arith.constant 0 : index
    %57 = vector.load %arg8[%c1_62, %c2_63, %c0_64] : memref<10x18x4xf32, #tpu.memory_space<vmem>>, vector<8x16x4xf32>
    %58 = vector.shape_cast %57 : vector<8x16x4xf32> to vector<128x4xf32>
    %c2_65 = arith.constant 2 : index
    %c1_66 = arith.constant 1 : index
    %c0_67 = arith.constant 0 : index
    %59 = vector.load %arg8[%c2_65, %c1_66, %c0_67] : memref<10x18x4xf32, #tpu.memory_space<vmem>>, vector<8x16x4xf32>
    %60 = vector.shape_cast %59 : vector<8x16x4xf32> to vector<128x4xf32>
    %c2_68 = arith.constant 2 : index
    %c2_69 = arith.constant 2 : index
    %c0_70 = arith.constant 0 : index
    %61 = vector.load %arg8[%c2_68, %c2_69, %c0_70] : memref<10x18x4xf32, #tpu.memory_space<vmem>>, vector<8x16x4xf32>
    %62 = vector.shape_cast %61 : vector<8x16x4xf32> to vector<128x4xf32>
    %63 = tpu.concatenate %56, %58, %60, %62 in 1 : vector<128x4xf32>, vector<128x4xf32>, vector<128x4xf32>, vector<128x4xf32> -> vector<128x16xf32>
    %c3 = arith.constant 3 : index
    %c0_71 = arith.constant 0 : index
    %c0_72 = arith.constant 0 : index
    %64 = vector.load %arg5[%c3, %c0_71, %c0_72] : memref<4x16x8xf32, #tpu.memory_space<vmem>>, vector<1x16x8xf32>
    %65 = vector.shape_cast %64 : vector<1x16x8xf32> to vector<16x8xf32>
    %cst_73 = arith.constant dense<0.000000e+00> : vector<128x8xf32>
    %66 = tpu.matmul %63, %65, %cst_73 {dimension_numbers = #tpu.dot_dimension_numbers<[1], [0], [0], [1], [0, 0, 1, 1], [], []>} : vector<128x16xf32>, vector<16x8xf32>, vector<128x8xf32> -> vector<128x8xf32>
    %67 = vector.broadcast %3 : vector<1x8xf32> to vector<128x8xf32>
    %68 = arith.addf %66, %67 : vector<128x8xf32>
    %c0_74 = arith.constant 0 : index
    %c3_75 = arith.constant 3 : index
    %c0_76 = arith.constant 0 : index
    %c0_77 = arith.constant 0 : index
    %69 = vector.load %arg7[%c0_74, %c3_75, %c0_76, %c0_77] : memref<1x4x128x8xf32, #tpu.memory_space<vmem>>, vector<1x1x128x8xf32>
    %70 = vector.shape_cast %69 : vector<1x1x128x8xf32> to vector<128x8xf32>
    %71 = vector.shape_cast %68 : vector<128x8xf32> to vector<1x1x128x8xf32>
    tpu.vector_store %arg7[%c0_74, %c3_75, %c0_76, %c0_77], %71 {strides = array<i32>} : memref<1x4x128x8xf32, #tpu.memory_space<vmem>>, vector<1x1x128x8xf32>,
    return
  }
  func.func @transform_0(%arg0: i32, %arg1: i32, %arg2: i32) -> (i32, i32, i32, i32) {
    %c0_i32 = arith.constant 0 : i32
    %c0_i32_0 = arith.constant 0 : i32
    %c0_i32_1 = arith.constant 0 : i32
    return %arg0, %arg1, %c0_i32, %c0_i32_0 : i32, i32, i32, i32
  }
  func.func @transform_1(%arg0: i32, %arg1: i32, %arg2: i32) -> (i32, i32, i32, i32) {
    %c0_i32 = arith.constant 0 : i32
    %c0_i32_0 = arith.constant 0 : i32
    %c0_i32_1 = arith.constant 0 : i32
    return %arg0, %arg1, %c0_i32, %c0_i32_0 : i32, i32, i32, i32
  }
  func.func @transform_2(%arg0: i32, %arg1: i32, %arg2: i32) -> (i32, i32, i32) {
    %c0_i32 = arith.constant 0 : i32
    %c0_i32_0 = arith.constant 0 : i32
    %c0_i32_1 = arith.constant 0 : i32
    return %c0_i32, %c0_i32_0, %arg2 : i32, i32, i32
  }
  func.func @transform_3(%arg0: i32, %arg1: i32, %arg2: i32) -> (i32, i32) {
    %c0_i32 = arith.constant 0 : i32
    %c0_i32_0 = arith.constant 0 : i32
    return %c0_i32, %arg2 : i32, i32
  }
  func.func @transform_4(%arg0: i32, %arg1: i32, %arg2: i32) -> (i32, i32, i32, i32) {
    %c0_i32 = arith.constant 0 : i32
    %c0_i32_0 = arith.constant 0 : i32
    return %arg0, %c0_i32, %arg1, %arg2 : i32, i32, i32, i32
  }
}

</mosaic_0001>

<llo_original>
// kernel: tpu_custom_call.1
$region0: #{tpu_custom_call.1}
  #allocation0 [shape = 'u32[]', space=smem, size = 0x4, offset = 0x4, fixed_abs, tag = 'smem constant byte address 0x4 - core index']
  #allocation1 [shape = 'u32[144,128]{1,0:T(1,128)}', space=vmem, size = 0x12000, scoped, tag = 'internal scratch']
  #allocation2 [shape = 'f32[10,18,4]{2,1,0:T(8,128)}', space=vmem, size = 0x1e000, scoped, tag = 'scratch operand']
  #allocation12 [shape = 's32[]', space=sflag, size = 0x4, offset = 0, fixed_abs, tag = 'sflag constant byte address 0x0 - dummy sync flag']
  %s0 = inlined_call_operand.hbm [shape: f32[2,16,18,4], index: 0, kind: input, shape index: {}]
  %s1 = inlined_call_operand.hbm [shape: f32[2,4,18,4], index: 1, kind: input, shape index: {}]
  %s2 = inlined_call_operand.hbm [shape: f32[4,16,8], index: 2, kind: input, shape index: {}]
  %s3 = inlined_call_operand.hbm [shape: f32[1,8], index: 3, kind: input, shape index: {}]
  %s4 = inlined_call_operand.hbm [shape: f32[2,4,256,8], index: 4, kind: output, shape index: {}]
  %s5 = sld [smem:[#allocation0]]
  $region69: #{tpu_custom_call.1} parent=0
    _
  %s7 = ssub.s32 1, %s5
  %s8 = scalar_select 0, %s7, %s5
  $region1: #{tpu_custom_call.1} parent=0
    #allocation3 [shape = 'u8[196608]{0}', space=vmem, size = 0x30000, scoped, tag = 'input window, operand 0']
    #allocation4 [shape = 's32[2]{0}', space=sflag, size = 0x8, scoped, tag = 'scoped memory for tpu_custom_call.1']
    #allocation5 [shape = 's32[2]{0}', space=sflag, size = 0x8, scoped, tag = 'scoped memory for tpu_custom_call.1']
    #allocation6 [shape = 'u8[49152]{0}', space=vmem, size = 0xc000, scoped, tag = 'input window, operand 1']
    #allocation7 [shape = 's32[2]{0}', space=sflag, size = 0x8, scoped, tag = 'scoped memory for tpu_custom_call.1']
    #allocation8 [shape = 'u8[32768]{0}', space=vmem, size = 0x8000, scoped, tag = 'input window, operand 2, single buffered']
    #allocation9 [shape = 'u8[512]{0}', space=vmem, size = 0x400, scoped, tag = 'input window, operand 3, single buffered']
    #allocation10 [shape = 's32[1]{0}', space=sflag, size = 0x4, scoped, tag = 'scoped memory for tpu_custom_call.1']
    #allocation11 [shape = 'u8[524288]{0}', space=vmem, size = 0x80000, scoped, tag = 'output window, operand 0']
    %9 = vsyncpa [#allocation4], 0
    %s10 = scalar_lea.sflag [#allocation4], 1
    %11 = vsyncpa %s10, 0
    %12 = vsyncpa [#allocation7], 0
    %s13 = scalar_lea.sflag [#allocation7], 1
    %14 = vsyncpa %s13, 0
    %15 = vsyncpa [#allocation10], 0
    %16 = vsyncpa [#allocation5], 0
    %s17 = scalar_lea.sflag [#allocation5], 1
    %18 = vsyncpa %s17, 0
    loop: start=0, step=1, limit=6
    $region2: #{tpu_custom_call.1} parent=1 // loop_pre_header
      _
    $region3: #{tpu_custom_call.1} parent=1 // loop_header
      %s20 = sphi 0, %s24
      %p21 = scmp.ge.s32.totalorder %s20, 6
      %s27 = sphi 0, %s46
      %s28 = sphi 0, %s42
      %s29 = sphi 0, %s38
      %s30 = sphi 0, %s27
      %s31 = sphi 0, %s28
      %s32 = sphi 0, %s29
      %s33 = sphi 0, %s30
      %s34 = sphi 0, %s31
      %s35 = sphi 0, %s32
      %s51 = sphi 0, %s53
      %s54 = sphi 0, %s51
      %s55 = sphi 0, %s54
      %s71 = sphi 0, %s55
      %s79 = sphi 0, %s81
      %s82 = sphi 0, %s79
      %s83 = sphi 0, %s82
      %s99 = sphi 0, %s83
      %s105 = sphi 0, %s107
      %s108 = sphi 0, %s105
      %s109 = sphi 0, %s108
      %s125 = sphi 0, %s109
      %s131 = sphi 0, %s133
      %s134 = sphi 0, %s131
      %s135 = sphi 0, %s134
      %s151 = sphi 0, %s135
      %s161 = sphi 0, %s163
      %s164 = sphi 0, %s161
      %s165 = sphi 0, %s164
      %s181 = sphi 0, %s165
    $region4: #{tpu_custom_call.1} parent=1 // loop_header_branch
      %23 = sbr.rel (%p21) target = $region8
    $region5: #{tpu_custom_call.1} parent=1 // loop_body
      %s25 = ssub.s32 %s20, 1
      %s26 = ssub.s32 %s20, 2
      %s36 = sadd.s32 1, %s29
      %p37 = scmp.ge.s32.totalorder %s36, 1
      %s38 = scalar_select %p37, 0, %s36
      %s39 = sadd.s32 1, %s28
      %s40 = scalar_select %p37, %s39, %s28
      %p41 = scmp.ge.s32.totalorder %s40, 2
      %s42 = scalar_select %p41, 0, %s40
      %s43 = sadd.s32 1, %s27
      %s44 = scalar_select %p41, %s43, %s27
      %p45 = scmp.ge.s32.totalorder %s44, 2
      %s46 = scalar_select %p45, 0, %s44
      %s47 = ssub.s32 %s27, %s46
      %s48 = ssub.s32 %s28, %s42
      %s49 = sor.u32 %s47, %s48
      %p50 = scmp.eq.s32.totalorder %s49, 0
      %s52 = sadd.s32 %s51, 1
      %s53 = scalar_select %p50, %s51, %s52
      %p56 = pneg %p50
      %p57 = scmp.eq.s32.totalorder %s20, 3
      %p58 = por %p56, %p57
      %p59 = scmp.ne.s32.totalorder %s51, %s54
      %p60 = scmp.eq.s32.totalorder %s20, 0
      %p61 = por %p59, %p60
      %p62 = scmp.ne.s32.totalorder %s51, %s54
      %p63 = scmp.eq.s32.totalorder %s25, 3
      %p64 = por %p62, %p63
      %p65 = scmp.ne.s32.totalorder %s54, %s55
      %p66 = scmp.eq.s32.totalorder %s25, 0
      %p67 = por %p65, %p66
      %p68 = scmp.ne.s32.totalorder %s54, %s55
      %p69 = scmp.eq.s32.totalorder %s26, 3
      %p70 = por %p68, %p69
      %p72 = scmp.ne.s32.totalorder %s55, %s71
      %p73 = scmp.eq.s32.totalorder %s26, 0
      %p74 = por %p72, %p73
      %s75 = ssub.s32 %s27, %s46
      %s76 = ssub.s32 %s28, %s42
      %s77 = sor.u32 %s75, %s76
      %p78 = scmp.eq.s32.totalorder %s77, 0
      %s80 = sadd.s32 %s79, 1
      %s81 = scalar_select %p78, %s79, %s80
      %p84 = pneg %p78
      %p85 = scmp.eq.s32.totalorder %s20, 3
      %p86 = por %p84, %p85
      %p87 = scmp.ne.s32.totalorder %s79, %s82
      %p88 = scmp.eq.s32.totalorder %s20, 0
      %p89 = por %p87, %p88
      %p90 = scmp.ne.s32.totalorder %s79, %s82
      %p91 = scmp.eq.s32.totalorder %s25, 3
      %p92 = por %p90, %p91
      %p93 = scmp.ne.s32.totalorder %s82, %s83
      %p94 = scmp.eq.s32.totalorder %s25, 0
      %p95 = por %p93, %p94
      %p96 = scmp.ne.s32.totalorder %s82, %s83
      %p97 = scmp.eq.s32.totalorder %s26, 3
      %p98 = por %p96, %p97
      %p100 = scmp.ne.s32.totalorder %s83, %s99
      %p101 = scmp.eq.s32.totalorder %s26, 0
      %p102 = por %p100, %p101
      %s103 = ssub.s32 %s29, %s38
      %p104 = scmp.eq.s32.totalorder %s103, 0
      %s106 = sadd.s32 %s105, 1
      %s107 = scalar_select %p104, %s105, %s106
      %p110 = pneg %p104
      %p111 = scmp.eq.s32.totalorder %s20, 3
      %p112 = por %p110, %p111
      %p113 = scmp.ne.s32.totalorder %s105, %s108
      %p114 = scmp.eq.s32.totalorder %s20, 0
      %p115 = por %p113, %p114
      %p116 = scmp.ne.s32.totalorder %s105, %s108
      %p117 = scmp.eq.s32.totalorder %s25, 3
      %p118 = por %p116, %p117
      %p119 = scmp.ne.s32.totalorder %s108, %s109
      %p120 = scmp.eq.s32.totalorder %s25, 0
      %p121 = por %p119, %p120
      %p122 = scmp.ne.s32.totalorder %s108, %s109
      %p123 = scmp.eq.s32.totalorder %s26, 3
      %p124 = por %p122, %p123
      %p126 = scmp.ne.s32.totalorder %s109, %s125
      %p127 = scmp.eq.s32.totalorder %s26, 0
      %p128 = por %p126, %p127
      %s129 = ssub.s32 %s29, %s38
      %p130 = scmp.eq.s32.totalorder %s129, 0
      %s132 = sadd.s32 %s131, 1
      %s133 = scalar_select %p130, %s131, %s132
      %p136 = pneg %p130
      %p137 = scmp.eq.s32.totalorder %s20, 3
      %p138 = por %p136, %p137
      %p139 = scmp.ne.s32.totalorder %s131, %s134
      %p140 = scmp.eq.s32.totalorder %s20, 0
      %p141 = por %p139, %p140
      %p142 = scmp.ne.s32.totalorder %s131, %s134
      %p143 = scmp.eq.s32.totalorder %s25, 3
      %p144 = por %p142, %p143
      %p145 = scmp.ne.s32.totalorder %s134, %s135
      %p146 = scmp.eq.s32.totalorder %s25, 0
      %p147 = por %p145, %p146
      %p148 = scmp.ne.s32.totalorder %s134, %s135
      %p149 = scmp.eq.s32.totalorder %s26, 3
      %p150 = por %p148, %p149
      %p152 = scmp.ne.s32.totalorder %s135, %s151
      %p153 = scmp.eq.s32.totalorder %s26, 0
      %p154 = por %p152, %p153
      %s155 = ssub.s32 %s27, %s46
      %s156 = ssub.s32 %s28, %s42
      %s157 = sor.u32 %s155, %s156
      %s158 = ssub.s32 %s29, %s38
      %s159 = sor.u32 %s157, %s158
      %p160 = scmp.eq.s32.totalorder %s159, 0
      %s162 = sadd.s32 %s161, 1
      %s163 = scalar_select %p160, %s161, %s162
      %p166 = pneg %p160
      %p167 = scmp.eq.s32.totalorder %s20, 3
      %p168 = por %p166, %p167
      %p169 = scmp.ne.s32.totalorder %s161, %s164
      %p170 = scmp.eq.s32.totalorder %s20, 0
      %p171 = por %p169, %p170
      %p172 = scmp.ne.s32.totalorder %s161, %s164
      %p173 = scmp.eq.s32.totalorder %s25, 3
      %p174 = por %p172, %p173
      %p175 = scmp.ne.s32.totalorder %s164, %s165
      %p176 = scmp.eq.s32.totalorder %s25, 0
      %p177 = por %p175, %p176
      %p178 = scmp.ne.s32.totalorder %s164, %s165
      %p179 = scmp.eq.s32.totalorder %s26, 3
      %p180 = por %p178, %p179
      %p182 = scmp.ne.s32.totalorder %s165, %s181
      %p183 = scmp.eq.s32.totalorder %s26, 0
      %p184 = por %p182, %p183
      %p185 = scmp.le.s32.totalorder 1, %s20
      %p186 = scmp.lt.s32.totalorder %s20, 5
      %p187 = pnand %p185, %p186
      %p188 = pneg %p187
      // Predicated region
      $region9: #{tpu_custom_call.1} parent=5 // pred_check
        _
      $region10: #{tpu_custom_call.1} parent=5 // pred_check_branch
        %190 = sbr.rel (%p187) target = $region12
      $region11: #{tpu_custom_call.1} parent=5 // pred_region
        %s191 = ssub.s32 %s20, 1
        // Predicated region
        $region13: #{tpu_custom_call.1} parent=11 // pred_check
          %p192 = pneg %p121
        $region14: #{tpu_custom_call.1} parent=11 // pred_check_branch
          %194 = sbr.rel (%p192) target = $region16
        $region15: #{tpu_custom_call.1} parent=11 // pred_region
          %s196 = ssub.s32 1024, 1024
          %197 = vsyncadd [#allocation7], %s196
          %s198 = smul.addr %s32, 128
          %s199 = scalar_lea.hbm %s2, %s198
          %s200 = sshll.u32 [#allocation8], 4
          %s201 = int_to_ptr.vmem [resolvable:$true] %s200
          %206 = dma.hbm_to_vmem [thread:$0]  %s199, 1024, %s201, [#allocation7], 128, 128, 8
        $region16: #{tpu_custom_call.1} parent=11 // pred_fallthru
          _
        // Predicated region
        $region17: #{tpu_custom_call.1} parent=11 // pred_check
          %p207 = pneg %p147
        $region18: #{tpu_custom_call.1} parent=11 // pred_check_branch
          %209 = sbr.rel (%p207) target = $region20
        $region19: #{tpu_custom_call.1} parent=11 // pred_region
          %s211 = ssub.s32 16, 16
          %212 = vsyncadd [#allocation10], %s211
          %s213 = smul.addr %s32, 16
          %s214 = scalar_lea.hbm %s3, %s213
          %s216 = sshll.u32 [#allocation9], 4
          %s217 = int_to_ptr.vmem [resolvable:$true] %s216
          %219 = dma.hbm_to_vmem [thread:$0]  %s214, 16, %s217, [#allocation10]
        $region20: #{tpu_custom_call.1} parent=11 // pred_fallthru
          _
      $region12: #{tpu_custom_call.1} parent=5 // pred_fallthru
        _
      %p220 = scmp.lt.s32.totalorder %s20, 4
      // Predicated region
      $region21: #{tpu_custom_call.1} parent=5 // pred_check
        %p221 = pneg %p220
      $region22: #{tpu_custom_call.1} parent=5 // pred_check_branch
        %223 = sbr.rel (%p221) target = $region24
      $region23: #{tpu_custom_call.1} parent=5 // pred_region
        // Predicated region
        $region25: #{tpu_custom_call.1} parent=23 // pred_check
          %p224 = pneg %p61
        $region26: #{tpu_custom_call.1} parent=23 // pred_check_branch
          %226 = sbr.rel (%p224) target = $region28
        $region27: #{tpu_custom_call.1} parent=23 // pred_region
          %s227 = sand.u32 %s51, 1
          %s228 = scalar_lea.sflag [#allocation4], %s227
          %s229 = sand.u32 %s51, 1
          %s230 = smul.addr %s229, 192
          %s231 = scalar_lea.vmem [#allocation3], %s230
          %s232 = smul.u32 8, %s28
          %s234 = ssub.s32 3072, 3072
          %235 = vsyncadd %s228, %s234
          %s236 = smul.addr %s232, 3
          %s237 = smul.addr %s27, 48
          %s238 = sadd.s32 %s236, %s237
          %s239 = smul.addr %s238, 128
          %s240 = scalar_lea.hbm %s0, %s239
          %s241 = sshll.u32 %s231, 4
          %s242 = int_to_ptr.vmem [resolvable:$true] %s241
          %247 = dma.hbm_to_vmem [thread:$0]  %s240, 3072, %s242, %s228, 128, 128, 8
        $region28: #{tpu_custom_call.1} parent=23 // pred_fallthru
          _
        // Predicated region
        $region29: #{tpu_custom_call.1} parent=23 // pred_check
          %p248 = pneg %p89
        $region30: #{tpu_custom_call.1} parent=23 // pred_check_branch
          %250 = sbr.rel (%p248) target = $region32
        $region31: #{tpu_custom_call.1} parent=23 // pred_region
          %s251 = sand.u32 %s20, 1
          %s252 = scalar_lea.sflag [#allocation7], %s251
          %s253 = sand.u32 %s79, 1
          %s254 = smul.addr %s253, 48
          %s255 = scalar_lea.vmem [#allocation6], %s254
          %s256 = smul.u32 2, %s28
          %s258 = ssub.s32 768, 768
          %259 = vsyncadd %s252, %s258
          %s260 = smul.addr %s256, 3
          %s261 = smul.addr %s27, 12
          %s262 = sadd.s32 %s260, %s261
          %s263 = smul.addr %s262, 128
          %s264 = scalar_lea.hbm %s1, %s263
          %s265 = sshll.u32 %s255, 4
          %s266 = int_to_ptr.vmem [resolvable:$true] %s265
          %271 = dma.hbm_to_vmem [thread:$0]  %s264, 768, %s266, %s252, 128, 128, 8
        $region32: #{tpu_custom_call.1} parent=23 // pred_fallthru
          _
      $region24: #{tpu_custom_call.1} parent=5 // pred_fallthru
        _
      %p272 = scmp.le.s32.totalorder 1, %s20
      %p273 = scmp.lt.s32.totalorder %s20, 5
      %p274 = pnand %p272, %p273
      %p275 = pneg %p274
      // Predicated region
      $region33: #{tpu_custom_call.1} parent=5 // pred_check
        _
      $region34: #{tpu_custom_call.1} parent=5 // pred_check_branch
        %277 = sbr.rel (%p274) target = $region36
      $region35: #{tpu_custom_call.1} parent=5 // pred_region
        %s278 = ssub.s32 %s20, 1
        %s279 = sand.u32 %s54, 1
        %s280 = scalar_lea.sflag [#allocation4], %s279
        %s281 = sand.u32 %s54, 1
        %s282 = smul.addr %s281, 192
        %s283 = scalar_lea.vmem [#allocation3], %s282
        // Predicated region
        $region37: #{tpu_custom_call.1} parent=35 // pred_check
          %p284 = pneg %p67
        $region38: #{tpu_custom_call.1} parent=35 // pred_check_branch
          %286 = sbr.rel (%p284) target = $region40
        $region39: #{tpu_custom_call.1} parent=35 // pred_region
          %287 = dma.done %s280, 3072
        $region40: #{tpu_custom_call.1} parent=35 // pred_fallthru
          _
        %s288 = sand.u32 %s25, 1
        %s289 = scalar_lea.sflag [#allocation7], %s288
        %s290 = sand.u32 %s82, 1
        %s291 = smul.addr %s290, 48
        %s292 = scalar_lea.vmem [#allocation6], %s291
        // Predicated region
        $region41: #{tpu_custom_call.1} parent=35 // pred_check
          %p293 = pneg %p95
        $region42: #{tpu_custom_call.1} parent=35 // pred_check_branch
          %295 = sbr.rel (%p293) target = $region44
        $region43: #{tpu_custom_call.1} parent=35 // pred_region
          %296 = dma.done %s289, 768
        $region44: #{tpu_custom_call.1} parent=35 // pred_fallthru
          _
        // Predicated region
        $region45: #{tpu_custom_call.1} parent=35 // pred_check
          %p297 = pneg %p121
        $region46: #{tpu_custom_call.1} parent=35 // pred_check_branch
          %299 = sbr.rel (%p297) target = $region48
        $region47: #{tpu_custom_call.1} parent=35 // pred_region
          %300 = dma.done [#allocation7], 1024
        $region48: #{tpu_custom_call.1} parent=35 // pred_fallthru
          _
        // Predicated region
        $region49: #{tpu_custom_call.1} parent=35 // pred_check
          %p301 = pneg %p147
        $region50: #{tpu_custom_call.1} parent=35 // pred_check_branch
          %303 = sbr.rel (%p301) target = $region52
        $region51: #{tpu_custom_call.1} parent=35 // pred_region
          %304 = dma.done [#allocation10], 16
        $region52: #{tpu_custom_call.1} parent=35 // pred_fallthru
          _
        %s305 = sand.u32 %s54, 1
        %s306 = scalar_lea.sflag [#allocation4], %s305
        %s307 = sand.u32 %s54, 1
        %s308 = smul.addr %s307, 192
        %s309 = scalar_lea.vmem [#allocation3], %s308
        %p310 = pneg %p67
        %p311 = pneg %p64
        %s312 = sand.u32 %s25, 1
        %s313 = scalar_lea.sflag [#allocation7], %s312
        %s314 = sand.u32 %s82, 1
        %s315 = smul.addr %s314, 48
        %s316 = scalar_lea.vmem [#allocation6], %s315
        %p317 = pneg %p95
        %p318 = pneg %p92
        %p319 = pneg %p121
        %p320 = pneg %p118
        %p321 = pneg %p147
        %p322 = pneg %p144
        %p323 = pneg %p177
        %p324 = pneg %p174
        %s325 = sand.u32 %s164, 1
        %s326 = scalar_lea.sflag [#allocation5], %s325
        %s327 = sand.u32 %s164, 1
        %s328 = smul.addr %s327, 512
        %s329 = scalar_lea.vmem [#allocation11], %s328
        %s330 = smul.u32 8, %s31
        %s331 = smul.u32 2, %s31
        %s332 = smul.u32 16, %s31
        %p333 = scmp.eq.s32.totalorder %s32, 0
        // Predicated region
        $region53: #{tpu_custom_call.1} parent=35 // pred_check
          %p334 = pneg %p333
        $region54: #{tpu_custom_call.1} parent=35 // pred_check_branch
          %336 = sbr.rel (%p334) target = $region56
        $region55: #{tpu_custom_call.1} parent=35 // pred_region
          %v337 = vld [vmem:[%s283] sm:$0xff]
          %v338 = vld [vmem:[%s283 + $0x8] sm:$0xff]
          %v339 = vld [vmem:[%s283 + $0x10] sm:$0x3]
          %v340 = vld [vmem:[%s283 + $0x18] sm:$0xff]
          %v341 = vld [vmem:[%s283 + $0x20] sm:$0xff]
          %v342 = vld [vmem:[%s283 + $0x28] sm:$0x3]
          %v343 = vld [vmem:[%s283 + $0x30] sm:$0xff]
          %v344 = vld [vmem:[%s283 + $0x38] sm:$0xff]
          %v345 = vld [vmem:[%s283 + $0x40] sm:$0x3]
          %v346 = vld [vmem:[%s283 + $0x48] sm:$0xff]
          %v347 = vld [vmem:[%s283 + $0x50] sm:$0xff]
          %v348 = vld [vmem:[%s283 + $0x58] sm:$0x3]
          %v349 = vld [vmem:[%s283 + $0x60] sm:$0xff]
          %v350 = vld [vmem:[%s283 + $0x68] sm:$0xff]
          %v351 = vld [vmem:[%s283 + $0x70] sm:$0x3]
          %v352 = vld [vmem:[%s283 + $0x78] sm:$0xff]
          %v353 = vld [vmem:[%s283 + $0x80] sm:$0xff]
          %v354 = vld [vmem:[%s283 + $0x88] sm:$0x3]
          %v355 = vld [vmem:[%s283 + $0x90] sm:$0xff]
          %v356 = vld [vmem:[%s283 + $0x98] sm:$0xff]
          %v357 = vld [vmem:[%s283 + $0xa0] sm:$0x3]
          %v358 = vld [vmem:[%s283 + $0xa8] sm:$0xff]
          %v359 = vld [vmem:[%s283 + $0xb0] sm:$0xff]
          %v360 = vld [vmem:[%s283 + $0xb8] sm:$0x3]
          %s361 = scalar_lea.vmem [#allocation2], 24
          %vm362 = vcmask 31744
          %363 = vst.msk [vmem:[%s361] sm:$0xff] %vm362, %v337
          %364 = vst.msk [vmem:[%s361 + $0x8] sm:$0xff] %vm362, %v338
          %vm365 = vcmask 25600
          %366 = vst.msk [vmem:[%s361 + $0x10] sm:$0x3] %vm365, %v339
          %367 = vst.msk [vmem:[%s361 + $0x18] sm:$0xff] %vm362, %v340
          %368 = vst.msk [vmem:[%s361 + $0x20] sm:$0xff] %vm362, %v341
          %369 = vst.msk [vmem:[%s361 + $0x28] sm:$0x3] %vm365, %v342
          %370 = vst.msk [vmem:[%s361 + $0x30] sm:$0xff] %vm362, %v343
          %371 = vst.msk [vmem:[%s361 + $0x38] sm:$0xff] %vm362, %v344
          %372 = vst.msk [vmem:[%s361 + $0x40] sm:$0x3] %vm365, %v345
          %373 = vst.msk [vmem:[%s361 + $0x48] sm:$0xff] %vm362, %v346
          %374 = vst.msk [vmem:[%s361 + $0x50] sm:$0xff] %vm362, %v347
          %375 = vst.msk [vmem:[%s361 + $0x58] sm:$0x3] %vm365, %v348
          %376 = vst.msk [vmem:[%s361 + $0x60] sm:$0xff] %vm362, %v349
          %377 = vst.msk [vmem:[%s361 + $0x68] sm:$0xff] %vm362, %v350
          %378 = vst.msk [vmem:[%s361 + $0x70] sm:$0x3] %vm365, %v351
          %379 = vst.msk [vmem:[%s361 + $0x78] sm:$0xff] %vm362, %v352
          %380 = vst.msk [vmem:[%s361 + $0x80] sm:$0xff] %vm362, %v353
          %381 = vst.msk [vmem:[%s361 + $0x88] sm:$0x3] %vm365, %v354
          %382 = vst.msk [vmem:[%s361 + $0x90] sm:$0xff] %vm362, %v355
          %383 = vst.msk [vmem:[%s361 + $0x98] sm:$0xff] %vm362, %v356
          %384 = vst.msk [vmem:[%s361 + $0xa0] sm:$0x3] %vm365, %v357
          %385 = vst.msk [vmem:[%s361 + $0xa8] sm:$0xff] %vm362, %v358
          %386 = vst.msk [vmem:[%s361 + $0xb0] sm:$0xff] %vm362, %v359
          %387 = vst.msk [vmem:[%s361 + $0xb8] sm:$0x3] %vm365, %v360
          %v388 = vld [vmem:[%s292] sm:$0xff]
          %v389 = vld [vmem:[%s292 + $0x8] sm:$0xff]
          %v390 = vld [vmem:[%s292 + $0x10] sm:$0x3]
          %391 = vst.msk [vmem:[#allocation2] sm:$0xff] %vm362, %v388
          %392 = vst.msk [vmem:[#allocation2 + $0x8] sm:$0xff] %vm362, %v389
          %393 = vst.msk [vmem:[#allocation2 + $0x10] sm:$0x3] %vm365, %v390
          %s394 = scalar_lea.vmem %s292, 24 [#allocation6]
          %v395 = vld [vmem:[%s394] sm:$0xff]
          %v396 = vld [vmem:[%s394 + $0x8] sm:$0xff]
          %v397 = vld [vmem:[%s394 + $0x10] sm:$0x3]
          %s398 = scalar_lea.vmem [#allocation2], 216
          %399 = vst.msk [vmem:[%s398] sm:$0xff] %vm362, %v395
          %400 = vst.msk [vmem:[%s398 + $0x8] sm:$0xff] %vm362, %v396
          %401 = vst.msk [vmem:[%s398 + $0x10] sm:$0x3] %vm365, %v397
        $region56: #{tpu_custom_call.1} parent=35 // pred_fallthru
          _
        %v402 = vld [vmem:[#allocation9] sm:$0x1]
        %v403 = vld [vmem:[#allocation2] sm:$0xff]
        %v404 = vld [vmem:[#allocation2 + $0x8] sm:$0xff]
        %v405 = vld [vmem:[#allocation2 + $0x18] sm:$0xff]
        %v406 = vld [vmem:[#allocation2 + $0x20] sm:$0xff]
        %v407 = vld [vmem:[#allocation2 + $0x30] sm:$0xff]
        %v408 = vld [vmem:[#allocation2 + $0x38] sm:$0xff]
        %v409 = vld [vmem:[#allocation2 + $0x48] sm:$0xff]
        %v410 = vld [vmem:[#allocation2 + $0x50] sm:$0xff]
        %v411 = vld [vmem:[#allocation2 + $0x60] sm:$0xff]
        %v412 = vld [vmem:[#allocation2 + $0x68] sm:$0xff]
        %v413 = vld [vmem:[#allocation2 + $0x78] sm:$0xff]
        %v414 = vld [vmem:[#allocation2 + $0x80] sm:$0xff]
        %v415 = vld [vmem:[#allocation2 + $0x90] sm:$0xff]
        %v416 = vld [vmem:[#allocation2 + $0x98] sm:$0xff]
        %v417 = vld [vmem:[#allocation2 + $0xa8] sm:$0xff]
        %v418 = vld [vmem:[#allocation2 + $0xb0] sm:$0xff]
        %v419 = vld [vmem:[#allocation2 + $0x1] sm:$0xff]
        %v420 = vld [vmem:[#allocation2 + $0x9] sm:$0xff]
        %v421 = vld [vmem:[#allocation2 + $0x19] sm:$0xff]
        %v422 = vld [vmem:[#allocation2 + $0x21] sm:$0xff]
        %v423 = vld [vmem:[#allocation2 + $0x31] sm:$0xff]
        %v424 = vld [vmem:[#allocation2 + $0x39] sm:$0xff]
        %v425 = vld [vmem:[#allocation2 + $0x49] sm:$0xff]
        %v426 = vld [vmem:[#allocation2 + $0x51] sm:$0xff]
        %v427 = vld [vmem:[#allocation2 + $0x61] sm:$0xff]
        %v428 = vld [vmem:[#allocation2 + $0x69] sm:$0xff]
        %v429 = vld [vmem:[#allocation2 + $0x79] sm:$0xff]
        %v430 = vld [vmem:[#allocation2 + $0x81] sm:$0xff]
        %v431 = vld [vmem:[#allocation2 + $0x91] sm:$0xff]
        %v432 = vld [vmem:[#allocation2 + $0x99] sm:$0xff]
        %v433 = vld [vmem:[#allocation2 + $0xa9] sm:$0xff]
        %v434 = vld [vmem:[#allocation2 + $0xb1] sm:$0xff]
        %s435 = scalar_lea.vmem [#allocation2], 24
        %v436 = vld [vmem:[%s435] sm:$0xff]
        %v437 = vld [vmem:[%s435 + $0x8] sm:$0xff]
        %v438 = vld [vmem:[%s435 + $0x18] sm:$0xff]
        %v439 = vld [vmem:[%s435 + $0x20] sm:$0xff]
        %v440 = vld [vmem:[%s435 + $0x30] sm:$0xff]
        %v441 = vld [vmem:[%s435 + $0x38] sm:$0xff]
        %v442 = vld [vmem:[%s435 + $0x48] sm:$0xff]
        %v443 = vld [vmem:[%s435 + $0x50] sm:$0xff]
        %v444 = vld [vmem:[%s435 + $0x60] sm:$0xff]
        %v445 = vld [vmem:[%s435 + $0x68] sm:$0xff]
        %v446 = vld [vmem:[%s435 + $0x78] sm:$0xff]
        %v447 = vld [vmem:[%s435 + $0x80] sm:$0xff]
        %v448 = vld [vmem:[%s435 + $0x90] sm:$0xff]
        %v449 = vld [vmem:[%s435 + $0x98] sm:$0xff]
        %v450 = vld [vmem:[%s435 + $0xa8] sm:$0xff]
        %v451 = vld [vmem:[%s435 + $0xb0] sm:$0xff]
        %v452 = vld [vmem:[%s435 + $0x1] sm:$0xff]
        %v453 = vld [vmem:[%s435 + $0x9] sm:$0xff]
        %v454 = vld [vmem:[%s435 + $0x19] sm:$0xff]
        %v455 = vld [vmem:[%s435 + $0x21] sm:$0xff]
        %v456 = vld [vmem:[%s435 + $0x31] sm:$0xff]
        %v457 = vld [vmem:[%s435 + $0x39] sm:$0xff]
        %v458 = vld [vmem:[%s435 + $0x49] sm:$0xff]
        %v459 = vld [vmem:[%s435 + $0x51] sm:$0xff]
        %v460 = vld [vmem:[%s435 + $0x61] sm:$0xff]
        %v461 = vld [vmem:[%s435 + $0x69] sm:$0xff]
        %v462 = vld [vmem:[%s435 + $0x79] sm:$0xff]
        %v463 = vld [vmem:[%s435 + $0x81] sm:$0xff]
        %v464 = vld [vmem:[%s435 + $0x91] sm:$0xff]
        %v465 = vld [vmem:[%s435 + $0x99] sm:$0xff]
        %v466 = vld [vmem:[%s435 + $0xa9] sm:$0xff]
        %v467 = vld [vmem:[%s435 + $0xb1] sm:$0xff]
        %484 = vrot.lane.b32.xlu0 %v419, 4
        %v485 = vpop.permute.xlu0 %484
        %486 = vrot.lane.b32.xlu0 %v420, 4
        %v487 = vpop.permute.xlu0 %486
        %488 = vrot.lane.b32.xlu0 %v421, 4
        %v489 = vpop.permute.xlu0 %488
        %490 = vrot.lane.b32.xlu0 %v422, 4
        %v491 = vpop.permute.xlu0 %490
        %492 = vrot.lane.b32.xlu0 %v423, 4
        %v493 = vpop.permute.xlu0 %492
        %494 = vrot.lane.b32.xlu0 %v424, 4
        %v495 = vpop.permute.xlu0 %494
        %496 = vrot.lane.b32.xlu0 %v425, 4
        %v497 = vpop.permute.xlu0 %496
        %498 = vrot.lane.b32.xlu0 %v426, 4
        %v499 = vpop.permute.xlu0 %498
        %500 = vrot.lane.b32.xlu0 %v427, 4
        %v501 = vpop.permute.xlu0 %500
        %502 = vrot.lane.b32.xlu0 %v428, 4
        %v503 = vpop.permute.xlu0 %502
        %504 = vrot.lane.b32.xlu0 %v429, 4
        %v505 = vpop.permute.xlu0 %504
        %506 = vrot.lane.b32.xlu0 %v430, 4
        %v507 = vpop.permute.xlu0 %506
        %508 = vrot.lane.b32.xlu0 %v431, 4
        %v509 = vpop.permute.xlu0 %508
        %510 = vrot.lane.b32.xlu0 %v432, 4
        %v511 = vpop.permute.xlu0 %510
        %512 = vrot.lane.b32.xlu0 %v433, 4
        %v513 = vpop.permute.xlu0 %512
        %514 = vrot.lane.b32.xlu0 %v434, 4
        %v515 = vpop.permute.xlu0 %514
        %548 = vrot.lane.b32.xlu0 %v436, 8
        %v549 = vpop.permute.xlu0 %548
        %550 = vrot.lane.b32.xlu0 %v437, 8
        %v551 = vpop.permute.xlu0 %550
        %552 = vrot.lane.b32.xlu0 %v438, 8
        %v553 = vpop.permute.xlu0 %552
        %554 = vrot.lane.b32.xlu0 %v439, 8
        %v555 = vpop.permute.xlu0 %554
        %556 = vrot.lane.b32.xlu0 %v440, 8
        %v557 = vpop.permute.xlu0 %556
        %558 = vrot.lane.b32.xlu0 %v441, 8
        %v559 = vpop.permute.xlu0 %558
        %560 = vrot.lane.b32.xlu0 %v442, 8
        %v561 = vpop.permute.xlu0 %560
        %562 = vrot.lane.b32.xlu0 %v443, 8
        %v563 = vpop.permute.xlu0 %562
        %564 = vrot.lane.b32.xlu0 %v444, 8
        %v565 = vpop.permute.xlu0 %564
        %566 = vrot.lane.b32.xlu0 %v445, 8
        %v567 = vpop.permute.xlu0 %566
        %568 = vrot.lane.b32.xlu0 %v446, 8
        %v569 = vpop.permute.xlu0 %568
        %570 = vrot.lane.b32.xlu0 %v447, 8
        %v571 = vpop.permute.xlu0 %570
        %572 = vrot.lane.b32.xlu0 %v448, 8
        %v573 = vpop.permute.xlu0 %572
        %574 = vrot.lane.b32.xlu0 %v449, 8
        %v575 = vpop.permute.xlu0 %574
        %576 = vrot.lane.b32.xlu0 %v450, 8
        %v577 = vpop.permute.xlu0 %576
        %578 = vrot.lane.b32.xlu0 %v451, 8
        %v579 = vpop.permute.xlu0 %578
        %612 = vrot.lane.b32.xlu0 %v452, 12
        %v613 = vpop.permute.xlu0 %612
        %614 = vrot.lane.b32.xlu0 %v453, 12
        %v615 = vpop.permute.xlu0 %614
        %616 = vrot.lane.b32.xlu0 %v454, 12
        %v617 = vpop.permute.xlu0 %616
        %618 = vrot.lane.b32.xlu0 %v455, 12
        %v619 = vpop.permute.xlu0 %618
        %620 = vrot.lane.b32.xlu0 %v456, 12
        %v621 = vpop.permute.xlu0 %620
        %622 = vrot.lane.b32.xlu0 %v457, 12
        %v623 = vpop.permute.xlu0 %622
        %624 = vrot.lane.b32.xlu0 %v458, 12
        %v625 = vpop.permute.xlu0 %624
        %626 = vrot.lane.b32.xlu0 %v459, 12
        %v627 = vpop.permute.xlu0 %626
        %628 = vrot.lane.b32.xlu0 %v460, 12
        %v629 = vpop.permute.xlu0 %628
        %630 = vrot.lane.b32.xlu0 %v461, 12
        %v631 = vpop.permute.xlu0 %630
        %632 = vrot.lane.b32.xlu0 %v462, 12
        %v633 = vpop.permute.xlu0 %632
        %634 = vrot.lane.b32.xlu0 %v463, 12
        %v635 = vpop.permute.xlu0 %634
        %636 = vrot.lane.b32.xlu0 %v464, 12
        %v637 = vpop.permute.xlu0 %636
        %638 = vrot.lane.b32.xlu0 %v465, 12
        %v639 = vpop.permute.xlu0 %638
        %640 = vrot.lane.b32.xlu0 %v466, 12
        %v641 = vpop.permute.xlu0 %640
        %642 = vrot.lane.b32.xlu0 %v467, 12
        %v643 = vpop.permute.xlu0 %642
        %vm660 = vcmask 31744
        %v661 = vsel %vm660, %v403, %v485
        %v662 = vsel %vm660, %v404, %v487
        %v663 = vsel %vm660, %v405, %v489
        %v664 = vsel %vm660, %v406, %v491
        %v665 = vsel %vm660, %v407, %v493
        %v666 = vsel %vm660, %v408, %v495
        %v667 = vsel %vm660, %v409, %v497
        %v668 = vsel %vm660, %v410, %v499
        %v669 = vsel %vm660, %v411, %v501
        %v670 = vsel %vm660, %v412, %v503
        %v671 = vsel %vm660, %v413, %v505
        %v672 = vsel %vm660, %v414, %v507
        %v673 = vsel %vm660, %v415, %v509
        %v674 = vsel %vm660, %v416, %v511
        %v675 = vsel %vm660, %v417, %v513
        %v676 = vsel %vm660, %v418, %v515
        %vm677 = vcmask 64512
        %v678 = vsel %vm677, %v661, %v549
        %v679 = vsel %vm677, %v662, %v551
        %v680 = vsel %vm677, %v663, %v553
        %v681 = vsel %vm677, %v664, %v555
        %v682 = vsel %vm677, %v665, %v557
        %v683 = vsel %vm677, %v666, %v559
        %v684 = vsel %vm677, %v667, %v561
        %v685 = vsel %vm677, %v668, %v563
        %v686 = vsel %vm677, %v669, %v565
        %v687 = vsel %vm677, %v670, %v567
        %v688 = vsel %vm677, %v671, %v569
        %v689 = vsel %vm677, %v672, %v571
        %v690 = vsel %vm677, %v673, %v573
        %v691 = vsel %vm677, %v674, %v575
        %v692 = vsel %vm677, %v675, %v577
        %v693 = vsel %vm677, %v676, %v579
        %vm694 = vcmask 97280
        %v695 = vsel %vm694, %v678, %v613
        %v696 = vsel %vm694, %v679, %v615
        %v697 = vsel %vm694, %v680, %v617
        %v698 = vsel %vm694, %v681, %v619
        %v699 = vsel %vm694, %v682, %v621
        %v700 = vsel %vm694, %v683, %v623
        %v701 = vsel %vm694, %v684, %v625
        %v702 = vsel %vm694, %v685, %v627
        %v703 = vsel %vm694, %v686, %v629
        %v704 = vsel %vm694, %v687, %v631
        %v705 = vsel %vm694, %v688, %v633
        %v706 = vsel %vm694, %v689, %v635
        %v707 = vsel %vm694, %v690, %v637
        %v708 = vsel %vm694, %v691, %v639
        %v709 = vsel %vm694, %v692, %v641
        %v710 = vsel %vm694, %v693, %v643
        %v711 = vld [vmem:[#allocation8] sm:$0xff]
        %v712 = vld [vmem:[#allocation8 + $0x8] sm:$0xff]
        %v714 = vlaneseq
        %v715 = vshrl.u32 %v714, 7
        %v716 = vsub.s32 0, %v715
        %v717 = vrot.slane %v402, %v716
        %vm719 = vcmask 130048
        %v721 = vsel %vm719, %v695, 0
        %v724 = vsel %vm719, %v696, 0
        %v727 = vsel %vm719, %v697, 0
        %v730 = vsel %vm719, %v698, 0
        %v733 = vsel %vm719, %v699, 0
        %v736 = vsel %vm719, %v700, 0
        %v739 = vsel %vm719, %v701, 0
        %v742 = vsel %vm719, %v702, 0
        %v745 = vsel %vm719, %v703, 0
        %v748 = vsel %vm719, %v704, 0
        %v751 = vsel %vm719, %v705, 0
        %v754 = vsel %vm719, %v706, 0
        %v757 = vsel %vm719, %v707, 0
        %v760 = vsel %vm719, %v708, 0
        %v763 = vsel %vm719, %v709, 0
        %v766 = vsel %vm719, %v710, 0
        %768 = vmatprep.subr.mxu0 0.0
        %769 = vmatpush1.msra.mxu0 %v711
        %770 = vmatprep.subr.mxu0 0.0
        %771 = vmatpush1.msra.mxu0 %v712
        %772 = vmatprep.subr.mxu0 0.0
        %773 = vmatpush1.msra.mxu0 0.0
        %774 = vmatprep.subr.mxu0 0.0
        %775 = vmatpush1.msra.mxu0 0.0
        %776 = vmatprep.subr.mxu0 0.0
        %777 = vmatpush1.msra.mxu0 0.0
        %778 = vmatprep.subr.mxu0 0.0
        %779 = vmatpush1.msra.mxu0 0.0
        %780 = vmatprep.subr.mxu0 0.0
        %781 = vmatpush1.msra.mxu0 0.0
        %782 = vmatprep.subr.mxu0 0.0
        %783 = vmatpush1.msra.mxu0 0.0
        %784 = vmatprep.subr.mxu0 0.0
        %785 = vmatpush1.msra.mxu0 0.0
        %786 = vmatprep.subr.mxu0 0.0
        %787 = vmatpush1.msra.mxu0 0.0
        %788 = vmatprep.subr.mxu0 0.0
        %789 = vmatpush1.msra.mxu0 0.0
        %790 = vmatprep.subr.mxu0 0.0
        %791 = vmatpush1.msra.mxu0 0.0
        %792 = vmatprep.subr.mxu0 0.0
        %793 = vmatpush1.msra.mxu0 0.0
        %794 = vmatprep.subr.mxu0 0.0
        %795 = vmatpush1.msra.mxu0 0.0
        %796 = vmatprep.subr.mxu0 0.0
        %797 = vmatpush1.msra.mxu0 0.0
        %798 = vmatprep.subr.mxu0 0.0
        %799 = vmatpush1.msra.mxu0 0.0
        %800 = vmatprep.subr.mxu0 0.0
        %801 = vmatpush1.msra.mxu0 0.0
        %802 = vmatprep.subr.mxu0 0.0
        %803 = vmatpush1.msra.mxu0 0.0
        %804 = vmatprep.subr.mxu0 0.0
        %805 = vmatpush1.msra.mxu0 0.0
        %806 = vmatprep.subr.mxu0 0.0
        %807 = vmatpush1.msra.mxu0 0.0
        %808 = vmatprep.subr.mxu0 0.0
        %809 = vmatpush1.msra.mxu0 0.0
        %810 = vmatprep.subr.mxu0 0.0
        %811 = vmatpush1.msra.mxu0 0.0
        %812 = vmatprep.subr.mxu0 0.0
        %813 = vmatpush1.msra.mxu0 0.0
        %814 = vmatprep.subr.mxu0 0.0
        %815 = vmatpush1.msra.mxu0 0.0
        %816 = vmatprep.subr.mxu0 0.0
        %817 = vmatpush1.msra.mxu0 0.0
        %818 = vmatprep.subr.mxu0 0.0
        %819 = vmatpush1.msra.mxu0 0.0
        %820 = vmatprep.subr.mxu0 0.0
        %821 = vmatpush1.msra.mxu0 0.0
        %822 = vmatprep.subr.mxu0 0.0
        %823 = vmatpush1.msra.mxu0 0.0
        %824 = vmatprep.subr.mxu0 0.0
        %825 = vmatpush1.msra.mxu0 0.0
        %826 = vmatprep.subr.mxu0 0.0
        %827 = vmatpush1.msra.mxu0 0.0
        %828 = vmatprep.subr.mxu0 0.0
        %829 = vmatpush1.msra.mxu0 0.0
        %830 = vmatprep.subr.mxu0 0.0
        %831 = vmatpush1.msra.mxu0 0.0
        %832 = vmatprep.mubr.f32.mxu0 0.0
        %833 = vmatmul.mubr.f32.gmra.mrb[0].mxu0 %v721
        %v834 = vpop.f32.mrb[0].mxu0
        %v835 = vadd.f32 %v717, %v834
        %v836 = vpop.f32.mrb[0].mxu0
        %837 = vmatprep.mubr.f32.mxu0 0.0
        %838 = vmatmul.mubr.f32.gmra.mrb[0].mxu0 %v724
        %v839 = vpop.f32.mrb[0].mxu0
        %v840 = vadd.f32 %v717, %v839
        %v841 = vpop.f32.mrb[0].mxu0
        %842 = vmatprep.mubr.f32.mxu0 0.0
        %843 = vmatmul.mubr.f32.gmra.mrb[0].mxu0 %v727
        %v844 = vpop.f32.mrb[0].mxu0
        %v845 = vadd.f32 %v717, %v844
        %v846 = vpop.f32.mrb[0].mxu0
        %847 = vmatprep.mubr.f32.mxu0 0.0
        %848 = vmatmul.mubr.f32.gmra.mrb[0].mxu0 %v730
        %v849 = vpop.f32.mrb[0].mxu0
        %v850 = vadd.f32 %v717, %v849
        %v851 = vpop.f32.mrb[0].mxu0
        %852 = vmatprep.mubr.f32.mxu0 0.0
        %853 = vmatmul.mubr.f32.gmra.mrb[0].mxu0 %v733
        %v854 = vpop.f32.mrb[0].mxu0
        %v855 = vadd.f32 %v717, %v854
        %v856 = vpop.f32.mrb[0].mxu0
        %857 = vmatprep.mubr.f32.mxu0 0.0
        %858 = vmatmul.mubr.f32.gmra.mrb[0].mxu0 %v736
        %v859 = vpop.f32.mrb[0].mxu0
        %v860 = vadd.f32 %v717, %v859
        %v861 = vpop.f32.mrb[0].mxu0
        %862 = vmatprep.mubr.f32.mxu0 0.0
        %863 = vmatmul.mubr.f32.gmra.mrb[0].mxu0 %v739
        %v864 = vpop.f32.mrb[0].mxu0
        %v865 = vadd.f32 %v717, %v864
        %v866 = vpop.f32.mrb[0].mxu0
        %867 = vmatprep.mubr.f32.mxu0 0.0
        %868 = vmatmul.mubr.f32.gmra.mrb[0].mxu0 %v742
        %v869 = vpop.f32.mrb[0].mxu0
        %v870 = vadd.f32 %v717, %v869
        %v871 = vpop.f32.mrb[0].mxu0
        %872 = vmatprep.mubr.f32.mxu0 0.0
        %873 = vmatmul.mubr.f32.gmra.mrb[0].mxu0 %v745
        %v874 = vpop.f32.mrb[0].mxu0
        %v875 = vadd.f32 %v717, %v874
        %v876 = vpop.f32.mrb[0].mxu0
        %877 = vmatprep.mubr.f32.mxu0 0.0
        %878 = vmatmul.mubr.f32.gmra.mrb[0].mxu0 %v748
        %v879 = vpop.f32.mrb[0].mxu0
        %v880 = vadd.f32 %v717, %v879
        %v881 = vpop.f32.mrb[0].mxu0
        %882 = vmatprep.mubr.f32.mxu0 0.0
        %883 = vmatmul.mubr.f32.gmra.mrb[0].mxu0 %v751
        %v884 = vpop.f32.mrb[0].mxu0
        %v885 = vadd.f32 %v717, %v884
        %v886 = vpop.f32.mrb[0].mxu0
        %887 = vmatprep.mubr.f32.mxu0 0.0
        %888 = vmatmul.mubr.f32.gmra.mrb[0].mxu0 %v754
        %v889 = vpop.f32.mrb[0].mxu0
        %v890 = vadd.f32 %v717, %v889
        %v891 = vpop.f32.mrb[0].mxu0
        %892 = vmatprep.mubr.f32.mxu0 0.0
        %893 = vmatmul.mubr.f32.gmra.mrb[0].mxu0 %v757
        %v894 = vpop.f32.mrb[0].mxu0
        %v895 = vadd.f32 %v717, %v894
        %v896 = vpop.f32.mrb[0].mxu0
        %897 = vmatprep.mubr.f32.mxu0 0.0
        %898 = vmatmul.mubr.f32.gmra.mrb[0].mxu0 %v760
        %v899 = vpop.f32.mrb[0].mxu0
        %v900 = vadd.f32 %v717, %v899
        %v901 = vpop.f32.mrb[0].mxu0
        %902 = vmatprep.mubr.f32.mxu0 0.0
        %903 = vmatmul.mubr.f32.gmra.mrb[0].mxu0 %v763
        %v904 = vpop.f32.mrb[0].mxu0
        %v905 = vadd.f32 %v717, %v904
        %v906 = vpop.f32.mrb[0].mxu0
        %907 = vmatprep.mubr.f32.mxu0 0.0
        %908 = vmatmul.mubr.f32.gmra.mrb[0].mxu0 %v766
        %v909 = vpop.f32.mrb[0].mxu0
        %v910 = vadd.f32 %v717, %v909
        %v911 = vpop.f32.mrb[0].mxu0
        %912 = vdwg.mxu0
        %913 = vst.msk [vmem:[%s329] sm:$0xff] %vm677, %v835
        %914 = vst.msk [vmem:[%s329 + $0x8] sm:$0xff] %vm677, %v840
        %915 = vst.msk [vmem:[%s329 + $0x10] sm:$0xff] %vm677, %v845
        %916 = vst.msk [vmem:[%s329 + $0x18] sm:$0xff] %vm677, %v850
        %917 = vst.msk [vmem:[%s329 + $0x20] sm:$0xff] %vm677, %v855
        %918 = vst.msk [vmem:[%s329 + $0x28] sm:$0xff] %vm677, %v860
        %919 = vst.msk [vmem:[%s329 + $0x30] sm:$0xff] %vm677, %v865
        %920 = vst.msk [vmem:[%s329 + $0x38] sm:$0xff] %vm677, %v870
        %921 = vst.msk [vmem:[%s329 + $0x40] sm:$0xff] %vm677, %v875
        %922 = vst.msk [vmem:[%s329 + $0x48] sm:$0xff] %vm677, %v880
        %923 = vst.msk [vmem:[%s329 + $0x50] sm:$0xff] %vm677, %v885
        %924 = vst.msk [vmem:[%s329 + $0x58] sm:$0xff] %vm677, %v890
        %925 = vst.msk [vmem:[%s329 + $0x60] sm:$0xff] %vm677, %v895
        %926 = vst.msk [vmem:[%s329 + $0x68] sm:$0xff] %vm677, %v900
        %927 = vst.msk [vmem:[%s329 + $0x70] sm:$0xff] %vm677, %v905
        %928 = vst.msk [vmem:[%s329 + $0x78] sm:$0xff] %vm677, %v910
        %v929 = vld [vmem:[#allocation2 + $0x1] sm:$0xff]
        %v930 = vld [vmem:[#allocation2 + $0x9] sm:$0xff]
        %v931 = vld [vmem:[#allocation2 + $0x19] sm:$0xff]
        %v932 = vld [vmem:[#allocation2 + $0x21] sm:$0xff]
        %v933 = vld [vmem:[#allocation2 + $0x31] sm:$0xff]
        %v934 = vld [vmem:[#allocation2 + $0x39] sm:$0xff]
        %v935 = vld [vmem:[#allocation2 + $0x49] sm:$0xff]
        %v936 = vld [vmem:[#allocation2 + $0x51] sm:$0xff]
        %v937 = vld [vmem:[#allocation2 + $0x61] sm:$0xff]
        %v938 = vld [vmem:[#allocation2 + $0x69] sm:$0xff]
        %v939 = vld [vmem:[#allocation2 + $0x79] sm:$0xff]
        %v940 = vld [vmem:[#allocation2 + $0x81] sm:$0xff]
        %v941 = vld [vmem:[#allocation2 + $0x91] sm:$0xff]
        %v942 = vld [vmem:[#allocation2 + $0x99] sm:$0xff]
        %v943 = vld [vmem:[#allocation2 + $0xa9] sm:$0xff]
        %v944 = vld [vmem:[#allocation2 + $0xb1] sm:$0xff]
        %v945 = vld [vmem:[#allocation2 + $0x2] sm:$0xff]
        %v946 = vld [vmem:[#allocation2 + $0xa] sm:$0xff]
        %v947 = vld [vmem:[#allocation2 + $0x1a] sm:$0xff]
        %v948 = vld [vmem:[#allocation2 + $0x22] sm:$0xff]
        %v949 = vld [vmem:[#allocation2 + $0x32] sm:$0xff]
        %v950 = vld [vmem:[#allocation2 + $0x3a] sm:$0xff]
        %v951 = vld [vmem:[#allocation2 + $0x4a] sm:$0xff]
        %v952 = vld [vmem:[#allocation2 + $0x52] sm:$0xff]
        %v953 = vld [vmem:[#allocation2 + $0x62] sm:$0xff]
        %v954 = vld [vmem:[#allocation2 + $0x6a] sm:$0xff]
        %v955 = vld [vmem:[#allocation2 + $0x7a] sm:$0xff]
        %v956 = vld [vmem:[#allocation2 + $0x82] sm:$0xff]
        %v957 = vld [vmem:[#allocation2 + $0x92] sm:$0xff]
        %v958 = vld [vmem:[#allocation2 + $0x9a] sm:$0xff]
        %v959 = vld [vmem:[#allocation2 + $0xaa] sm:$0xff]
        %v960 = vld [vmem:[#allocation2 + $0xb2] sm:$0xff]
        %v961 = vld [vmem:[%s435 + $0x1] sm:$0xff]
        %v962 = vld [vmem:[%s435 + $0x9] sm:$0xff]
        %v963 = vld [vmem:[%s435 + $0x19] sm:$0xff]
        %v964 = vld [vmem:[%s435 + $0x21] sm:$0xff]
        %v965 = vld [vmem:[%s435 + $0x31] sm:$0xff]
        %v966 = vld [vmem:[%s435 + $0x39] sm:$0xff]
        %v967 = vld [vmem:[%s435 + $0x49] sm:$0xff]
        %v968 = vld [vmem:[%s435 + $0x51] sm:$0xff]
        %v969 = vld [vmem:[%s435 + $0x61] sm:$0xff]
        %v970 = vld [vmem:[%s435 + $0x69] sm:$0xff]
        %v971 = vld [vmem:[%s435 + $0x79] sm:$0xff]
        %v972 = vld [vmem:[%s435 + $0x81] sm:$0xff]
        %v973 = vld [vmem:[%s435 + $0x91] sm:$0xff]
        %v974 = vld [vmem:[%s435 + $0x99] sm:$0xff]
        %v975 = vld [vmem:[%s435 + $0xa9] sm:$0xff]
        %v976 = vld [vmem:[%s435 + $0xb1] sm:$0xff]
        %v977 = vld [vmem:[%s435 + $0x2] sm:$0xff]
        %v978 = vld [vmem:[%s435 + $0xa] sm:$0xff]
        %v979 = vld [vmem:[%s435 + $0x1a] sm:$0xff]
        %v980 = vld [vmem:[%s435 + $0x22] sm:$0xff]
        %v981 = vld [vmem:[%s435 + $0x32] sm:$0xff]
        %v982 = vld [vmem:[%s435 + $0x3a] sm:$0xff]
        %v983 = vld [vmem:[%s435 + $0x4a] sm:$0xff]
        %v984 = vld [vmem:[%s435 + $0x52] sm:$0xff]
        %v985 = vld [vmem:[%s435 + $0x62] sm:$0xff]
        %v986 = vld [vmem:[%s435 + $0x6a] sm:$0xff]
        %v987 = vld [vmem:[%s435 + $0x7a] sm:$0xff]
        %v988 = vld [vmem:[%s435 + $0x82] sm:$0xff]
        %v989 = vld [vmem:[%s435 + $0x92] sm:$0xff]
        %v990 = vld [vmem:[%s435 + $0x9a] sm:$0xff]
        %v991 = vld [vmem:[%s435 + $0xaa] sm:$0xff]
        %v992 = vld [vmem:[%s435 + $0xb2] sm:$0xff]
        %1009 = vrot.lane.b32.xlu0 %v945, 4
        %v1010 = vpop.permute.xlu0 %1009
        %1011 = vrot.lane.b32.xlu0 %v946, 4
        %v1012 = vpop.permute.xlu0 %1011
        %1013 = vrot.lane.b32.xlu0 %v947, 4
        %v1014 = vpop.permute.xlu0 %1013
        %1015 = vrot.lane.b32.xlu0 %v948, 4
        %v1016 = vpop.permute.xlu0 %1015
        %1017 = vrot.lane.b32.xlu0 %v949, 4
        %v1018 = vpop.permute.xlu0 %1017
        %1019 = vrot.lane.b32.xlu0 %v950, 4
        %v1020 = vpop.permute.xlu0 %1019
        %1021 = vrot.lane.b32.xlu0 %v951, 4
        %v1022 = vpop.permute.xlu0 %1021
        %1023 = vrot.lane.b32.xlu0 %v952, 4
        %v1024 = vpop.permute.xlu0 %1023
        %1025 = vrot.lane.b32.xlu0 %v953, 4
        %v1026 = vpop.permute.xlu0 %1025
        %1027 = vrot.lane.b32.xlu0 %v954, 4
        %v1028 = vpop.permute.xlu0 %1027
        %1029 = vrot.lane.b32.xlu0 %v955, 4
        %v1030 = vpop.permute.xlu0 %1029
        %1031 = vrot.lane.b32.xlu0 %v956, 4
        %v1032 = vpop.permute.xlu0 %1031
        %1033 = vrot.lane.b32.xlu0 %v957, 4
        %v1034 = vpop.permute.xlu0 %1033
        %1035 = vrot.lane.b32.xlu0 %v958, 4
        %v1036 = vpop.permute.xlu0 %1035
        %1037 = vrot.lane.b32.xlu0 %v959, 4
        %v1038 = vpop.permute.xlu0 %1037
        %1039 = vrot.lane.b32.xlu0 %v960, 4
        %v1040 = vpop.permute.xlu0 %1039
        %1073 = vrot.lane.b32.xlu0 %v961, 8
        %v1074 = vpop.permute.xlu0 %1073
        %1075 = vrot.lane.b32.xlu0 %v962, 8
        %v1076 = vpop.permute.xlu0 %1075
        %1077 = vrot.lane.b32.xlu0 %v963, 8
        %v1078 = vpop.permute.xlu0 %1077
        %1079 = vrot.lane.b32.xlu0 %v964, 8
        %v1080 = vpop.permute.xlu0 %1079
        %1081 = vrot.lane.b32.xlu0 %v965, 8
        %v1082 = vpop.permute.xlu0 %1081
        %1083 = vrot.lane.b32.xlu0 %v966, 8
        %v1084 = vpop.permute.xlu0 %1083
        %1085 = vrot.lane.b32.xlu0 %v967, 8
        %v1086 = vpop.permute.xlu0 %1085
        %1087 = vrot.lane.b32.xlu0 %v968, 8
        %v1088 = vpop.permute.xlu0 %1087
        %1089 = vrot.lane.b32.xlu0 %v969, 8
        %v1090 = vpop.permute.xlu0 %1089
        %1091 = vrot.lane.b32.xlu0 %v970, 8
        %v1092 = vpop.permute.xlu0 %1091
        %1093 = vrot.lane.b32.xlu0 %v971, 8
        %v1094 = vpop.permute.xlu0 %1093
        %1095 = vrot.lane.b32.xlu0 %v972, 8
        %v1096 = vpop.permute.xlu0 %1095
        %1097 = vrot.lane.b32.xlu0 %v973, 8
        %v1098 = vpop.permute.xlu0 %1097
        %1099 = vrot.lane.b32.xlu0 %v974, 8
        %v1100 = vpop.permute.xlu0 %1099
        %1101 = vrot.lane.b32.xlu0 %v975, 8
        %v1102 = vpop.permute.xlu0 %1101
        %1103 = vrot.lane.b32.xlu0 %v976, 8
        %v1104 = vpop.permute.xlu0 %1103
        %1137 = vrot.lane.b32.xlu0 %v977, 12
        %v1138 = vpop.permute.xlu0 %1137
        %1139 = vrot.lane.b32.xlu0 %v978, 12
        %v1140 = vpop.permute.xlu0 %1139
        %1141 = vrot.lane.b32.xlu0 %v979, 12
        %v1142 = vpop.permute.xlu0 %1141
        %1143 = vrot.lane.b32.xlu0 %v980, 12
        %v1144 = vpop.permute.xlu0 %1143
        %1145 = vrot.lane.b32.xlu0 %v981, 12
        %v1146 = vpop.permute.xlu0 %1145
        %1147 = vrot.lane.b32.xlu0 %v982, 12
        %v1148 = vpop.permute.xlu0 %1147
        %1149 = vrot.lane.b32.xlu0 %v983, 12
        %v1150 = vpop.permute.xlu0 %1149
        %1151 = vrot.lane.b32.xlu0 %v984, 12
        %v1152 = vpop.permute.xlu0 %1151
        %1153 = vrot.lane.b32.xlu0 %v985, 12
        %v1154 = vpop.permute.xlu0 %1153
        %1155 = vrot.lane.b32.xlu0 %v986, 12
        %v1156 = vpop.permute.xlu0 %1155
        %1157 = vrot.lane.b32.xlu0 %v987, 12
        %v1158 = vpop.permute.xlu0 %1157
        %1159 = vrot.lane.b32.xlu0 %v988, 12
        %v1160 = vpop.permute.xlu0 %1159
        %1161 = vrot.lane.b32.xlu0 %v989, 12
        %v1162 = vpop.permute.xlu0 %1161
        %1163 = vrot.lane.b32.xlu0 %v990, 12
        %v1164 = vpop.permute.xlu0 %1163
        %1165 = vrot.lane.b32.xlu0 %v991, 12
        %v1166 = vpop.permute.xlu0 %1165
        %1167 = vrot.lane.b32.xlu0 %v992, 12
        %v1168 = vpop.permute.xlu0 %1167
        %v1185 = vsel %vm660, %v929, %v1010
        %v1186 = vsel %vm660, %v930, %v1012
        %v1187 = vsel %vm660, %v931, %v1014
        %v1188 = vsel %vm660, %v932, %v1016
        %v1189 = vsel %vm660, %v933, %v1018
        %v1190 = vsel %vm660, %v934, %v1020
        %v1191 = vsel %vm660, %v935, %v1022
        %v1192 = vsel %vm660, %v936, %v1024
        %v1193 = vsel %vm660, %v937, %v1026
        %v1194 = vsel %vm660, %v938, %v1028
        %v1195 = vsel %vm660, %v939, %v1030
        %v1196 = vsel %vm660, %v940, %v1032
        %v1197 = vsel %vm660, %v941, %v1034
        %v1198 = vsel %vm660, %v942, %v1036
        %v1199 = vsel %vm660, %v943, %v1038
        %v1200 = vsel %vm660, %v944, %v1040
        %v1201 = vsel %vm677, %v1185, %v1074
        %v1202 = vsel %vm677, %v1186, %v1076
        %v1203 = vsel %vm677, %v1187, %v1078
        %v1204 = vsel %vm677, %v1188, %v1080
        %v1205 = vsel %vm677, %v1189, %v1082
        %v1206 = vsel %vm677, %v1190, %v1084
        %v1207 = vsel %vm677, %v1191, %v1086
        %v1208 = vsel %vm677, %v1192, %v1088
        %v1209 = vsel %vm677, %v1193, %v1090
        %v1210 = vsel %vm677, %v1194, %v1092
        %v1211 = vsel %vm677, %v1195, %v1094
        %v1212 = vsel %vm677, %v1196, %v1096
        %v1213 = vsel %vm677, %v1197, %v1098
        %v1214 = vsel %vm677, %v1198, %v1100
        %v1215 = vsel %vm677, %v1199, %v1102
        %v1216 = vsel %vm677, %v1200, %v1104
        %v1217 = vsel %vm694, %v1201, %v1138
        %v1218 = vsel %vm694, %v1202, %v1140
        %v1219 = vsel %vm694, %v1203, %v1142
        %v1220 = vsel %vm694, %v1204, %v1144
        %v1221 = vsel %vm694, %v1205, %v1146
        %v1222 = vsel %vm694, %v1206, %v1148
        %v1223 = vsel %vm694, %v1207, %v1150
        %v1224 = vsel %vm694, %v1208, %v1152
        %v1225 = vsel %vm694, %v1209, %v1154
        %v1226 = vsel %vm694, %v1210, %v1156
        %v1227 = vsel %vm694, %v1211, %v1158
        %v1228 = vsel %vm694, %v1212, %v1160
        %v1229 = vsel %vm694, %v1213, %v1162
        %v1230 = vsel %vm694, %v1214, %v1164
        %v1231 = vsel %vm694, %v1215, %v1166
        %v1232 = vsel %vm694, %v1216, %v1168
        %s1233 = scalar_lea.vmem [#allocation8], 16
        %v1234 = vld [vmem:[%s1233] sm:$0xff]
        %v1235 = vld [vmem:[%s1233 + $0x8] sm:$0xff]
        %v1237 = vsel %vm719, %v1217, 0
        %v1240 = vsel %vm719, %v1218, 0
        %v1243 = vsel %vm719, %v1219, 0
        %v1246 = vsel %vm719, %v1220, 0
        %v1249 = vsel %vm719, %v1221, 0
        %v1252 = vsel %vm719, %v1222, 0
        %v1255 = vsel %vm719, %v1223, 0
        %v1258 = vsel %vm719, %v1224, 0
        %v1261 = vsel %vm719, %v1225, 0
        %v1264 = vsel %vm719, %v1226, 0
        %v1267 = vsel %vm719, %v1227, 0
        %v1270 = vsel %vm719, %v1228, 0
        %v1273 = vsel %vm719, %v1229, 0
        %v1276 = vsel %vm719, %v1230, 0
        %v1279 = vsel %vm719, %v1231, 0
        %v1282 = vsel %vm719, %v1232, 0
        %1284 = vmatprep.subr.mxu0 0.0
        %1285 = vmatpush1.msra.mxu0 %v1234
        %1286 = vmatprep.subr.mxu0 0.0
        %1287 = vmatpush1.msra.mxu0 %v1235
        %1288 = vmatprep.subr.mxu0 0.0
        %1289 = vmatpush1.msra.mxu0 0.0
        %1290 = vmatprep.subr.mxu0 0.0
        %1291 = vmatpush1.msra.mxu0 0.0
        %1292 = vmatprep.subr.mxu0 0.0
        %1293 = vmatpush1.msra.mxu0 0.0
        %1294 = vmatprep.subr.mxu0 0.0
        %1295 = vmatpush1.msra.mxu0 0.0
        %1296 = vmatprep.subr.mxu0 0.0
        %1297 = vmatpush1.msra.mxu0 0.0
        %1298 = vmatprep.subr.mxu0 0.0
        %1299 = vmatpush1.msra.mxu0 0.0
        %1300 = vmatprep.subr.mxu0 0.0
        %1301 = vmatpush1.msra.mxu0 0.0
        %1302 = vmatprep.subr.mxu0 0.0
        %1303 = vmatpush1.msra.mxu0 0.0
        %1304 = vmatprep.subr.mxu0 0.0
        %1305 = vmatpush1.msra.mxu0 0.0
        %1306 = vmatprep.subr.mxu0 0.0
        %1307 = vmatpush1.msra.mxu0 0.0
        %1308 = vmatprep.subr.mxu0 0.0
        %1309 = vmatpush1.msra.mxu0 0.0
        %1310 = vmatprep.subr.mxu0 0.0
        %1311 = vmatpush1.msra.mxu0 0.0
        %1312 = vmatprep.subr.mxu0 0.0
        %1313 = vmatpush1.msra.mxu0 0.0
        %1314 = vmatprep.subr.mxu0 0.0
        %1315 = vmatpush1.msra.mxu0 0.0
        %1316 = vmatprep.subr.mxu0 0.0
        %1317 = vmatpush1.msra.mxu0 0.0
        %1318 = vmatprep.subr.mxu0 0.0
        %1319 = vmatpush1.msra.mxu0 0.0
        %1320 = vmatprep.subr.mxu0 0.0
        %1321 = vmatpush1.msra.mxu0 0.0
        %1322 = vmatprep.subr.mxu0 0.0
        %1323 = vmatpush1.msra.mxu0 0.0
        %1324 = vmatprep.subr.mxu0 0.0
        %1325 = vmatpush1.msra.mxu0 0.0
        %1326 = vmatprep.subr.mxu0 0.0
        %1327 = vmatpush1.msra.mxu0 0.0
        %1328 = vmatprep.subr.mxu0 0.0
        %1329 = vmatpush1.msra.mxu0 0.0
        %1330 = vmatprep.subr.mxu0 0.0
        %1331 = vmatpush1.msra.mxu0 0.0
        %1332 = vmatprep.subr.mxu0 0.0
        %1333 = vmatpush1.msra.mxu0 0.0
        %1334 = vmatprep.subr.mxu0 0.0
        %1335 = vmatpush1.msra.mxu0 0.0
        %1336 = vmatprep.subr.mxu0 0.0
        %1337 = vmatpush1.msra.mxu0 0.0
        %1338 = vmatprep.subr.mxu0 0.0
        %1339 = vmatpush1.msra.mxu0 0.0
        %1340 = vmatprep.subr.mxu0 0.0
        %1341 = vmatpush1.msra.mxu0 0.0
        %1342 = vmatprep.subr.mxu0 0.0
        %1343 = vmatpush1.msra.mxu0 0.0
        %1344 = vmatprep.subr.mxu0 0.0
        %1345 = vmatpush1.msra.mxu0 0.0
        %1346 = vmatprep.subr.mxu0 0.0
        %1347 = vmatpush1.msra.mxu0 0.0
        %1348 = vmatprep.mubr.f32.mxu0 0.0
        %1349 = vmatmul.mubr.f32.gmra.mrb[0].mxu0 %v1237
        %v1350 = vpop.f32.mrb[0].mxu0
        %v1351 = vadd.f32 %v717, %v1350
        %v1352 = vpop.f32.mrb[0].mxu0
        %1353 = vmatprep.mubr.f32.mxu0 0.0
        %1354 = vmatmul.mubr.f32.gmra.mrb[0].mxu0 %v1240
        %v1355 = vpop.f32.mrb[0].mxu0
        %v1356 = vadd.f32 %v717, %v1355
        %v1357 = vpop.f32.mrb[0].mxu0
        %1358 = vmatprep.mubr.f32.mxu0 0.0
        %1359 = vmatmul.mubr.f32.gmra.mrb[0].mxu0 %v1243
        %v1360 = vpop.f32.mrb[0].mxu0
        %v1361 = vadd.f32 %v717, %v1360
        %v1362 = vpop.f32.mrb[0].mxu0
        %1363 = vmatprep.mubr.f32.mxu0 0.0
        %1364 = vmatmul.mubr.f32.gmra.mrb[0].mxu0 %v1246
        %v1365 = vpop.f32.mrb[0].mxu0
        %v1366 = vadd.f32 %v717, %v1365
        %v1367 = vpop.f32.mrb[0].mxu0
        %1368 = vmatprep.mubr.f32.mxu0 0.0
        %1369 = vmatmul.mubr.f32.gmra.mrb[0].mxu0 %v1249
        %v1370 = vpop.f32.mrb[0].mxu0
        %v1371 = vadd.f32 %v717, %v1370
        %v1372 = vpop.f32.mrb[0].mxu0
        %1373 = vmatprep.mubr.f32.mxu0 0.0
        %1374 = vmatmul.mubr.f32.gmra.mrb[0].mxu0 %v1252
        %v1375 = vpop.f32.mrb[0].mxu0
        %v1376 = vadd.f32 %v717, %v1375
        %v1377 = vpop.f32.mrb[0].mxu0
        %1378 = vmatprep.mubr.f32.mxu0 0.0
        %1379 = vmatmul.mubr.f32.gmra.mrb[0].mxu0 %v1255
        %v1380 = vpop.f32.mrb[0].mxu0
        %v1381 = vadd.f32 %v717, %v1380
        %v1382 = vpop.f32.mrb[0].mxu0
        %1383 = vmatprep.mubr.f32.mxu0 0.0
        %1384 = vmatmul.mubr.f32.gmra.mrb[0].mxu0 %v1258
        %v1385 = vpop.f32.mrb[0].mxu0
        %v1386 = vadd.f32 %v717, %v1385
        %v1387 = vpop.f32.mrb[0].mxu0
        %1388 = vmatprep.mubr.f32.mxu0 0.0
        %1389 = vmatmul.mubr.f32.gmra.mrb[0].mxu0 %v1261
        %v1390 = vpop.f32.mrb[0].mxu0
        %v1391 = vadd.f32 %v717, %v1390
        %v1392 = vpop.f32.mrb[0].mxu0
        %1393 = vmatprep.mubr.f32.mxu0 0.0
        %1394 = vmatmul.mubr.f32.gmra.mrb[0].mxu0 %v1264
        %v1395 = vpop.f32.mrb[0].mxu0
        %v1396 = vadd.f32 %v717, %v1395
        %v1397 = vpop.f32.mrb[0].mxu0
        %1398 = vmatprep.mubr.f32.mxu0 0.0
        %1399 = vmatmul.mubr.f32.gmra.mrb[0].mxu0 %v1267
        %v1400 = vpop.f32.mrb[0].mxu0
        %v1401 = vadd.f32 %v717, %v1400
        %v1402 = vpop.f32.mrb[0].mxu0
        %1403 = vmatprep.mubr.f32.mxu0 0.0
        %1404 = vmatmul.mubr.f32.gmra.mrb[0].mxu0 %v1270
        %v1405 = vpop.f32.mrb[0].mxu0
        %v1406 = vadd.f32 %v717, %v1405
        %v1407 = vpop.f32.mrb[0].mxu0
        %1408 = vmatprep.mubr.f32.mxu0 0.0
        %1409 = vmatmul.mubr.f32.gmra.mrb[0].mxu0 %v1273
        %v1410 = vpop.f32.mrb[0].mxu0
        %v1411 = vadd.f32 %v717, %v1410
        %v1412 = vpop.f32.mrb[0].mxu0
        %1413 = vmatprep.mubr.f32.mxu0 0.0
        %1414 = vmatmul.mubr.f32.gmra.mrb[0].mxu0 %v1276
        %v1415 = vpop.f32.mrb[0].mxu0
        %v1416 = vadd.f32 %v717, %v1415
        %v1417 = vpop.f32.mrb[0].mxu0
        %1418 = vmatprep.mubr.f32.mxu0 0.0
        %1419 = vmatmul.mubr.f32.gmra.mrb[0].mxu0 %v1279
        %v1420 = vpop.f32.mrb[0].mxu0
        %v1421 = vadd.f32 %v717, %v1420
        %v1422 = vpop.f32.mrb[0].mxu0
        %1423 = vmatprep.mubr.f32.mxu0 0.0
        %1424 = vmatmul.mubr.f32.gmra.mrb[0].mxu0 %v1282
        %v1425 = vpop.f32.mrb[0].mxu0
        %v1426 = vadd.f32 %v717, %v1425
        %v1427 = vpop.f32.mrb[0].mxu0
        %1428 = vdwg.mxu0
        %s1429 = scalar_lea.vmem %s329, 128 [#allocation11]
        %1430 = vst.msk [vmem:[%s1429] sm:$0xff] %vm677, %v1351
        %1431 = vst.msk [vmem:[%s1429 + $0x8] sm:$0xff] %vm677, %v1356
        %1432 = vst.msk [vmem:[%s1429 + $0x10] sm:$0xff] %vm677, %v1361
        %1433 = vst.msk [vmem:[%s1429 + $0x18] sm:$0xff] %vm677, %v1366
        %1434 = vst.msk [vmem:[%s1429 + $0x20] sm:$0xff] %vm677, %v1371
        %1435 = vst.msk [vmem:[%s1429 + $0x28] sm:$0xff] %vm677, %v1376
        %1436 = vst.msk [vmem:[%s1429 + $0x30] sm:$0xff] %vm677, %v1381
        %1437 = vst.msk [vmem:[%s1429 + $0x38] sm:$0xff] %vm677, %v1386
        %1438 = vst.msk [vmem:[%s1429 + $0x40] sm:$0xff] %vm677, %v1391
        %1439 = vst.msk [vmem:[%s1429 + $0x48] sm:$0xff] %vm677, %v1396
        %1440 = vst.msk [vmem:[%s1429 + $0x50] sm:$0xff] %vm677, %v1401
        %1441 = vst.msk [vmem:[%s1429 + $0x58] sm:$0xff] %vm677, %v1406
        %1442 = vst.msk [vmem:[%s1429 + $0x60] sm:$0xff] %vm677, %v1411
        %1443 = vst.msk [vmem:[%s1429 + $0x68] sm:$0xff] %vm677, %v1416
        %1444 = vst.msk [vmem:[%s1429 + $0x70] sm:$0xff] %vm677, %v1421
        %1445 = vst.msk [vmem:[%s1429 + $0x78] sm:$0xff] %vm677, %v1426
        %v1446 = vld [vmem:[%s435] sm:$0xff]
        %v1447 = vld [vmem:[%s435 + $0x8] sm:$0xff]
        %v1448 = vld [vmem:[%s435 + $0x18] sm:$0xff]
        %v1449 = vld [vmem:[%s435 + $0x20] sm:$0xff]
        %v1450 = vld [vmem:[%s435 + $0x30] sm:$0xff]
        %v1451 = vld [vmem:[%s435 + $0x38] sm:$0xff]
        %v1452 = vld [vmem:[%s435 + $0x48] sm:$0xff]
        %v1453 = vld [vmem:[%s435 + $0x50] sm:$0xff]
        %v1454 = vld [vmem:[%s435 + $0x60] sm:$0xff]
        %v1455 = vld [vmem:[%s435 + $0x68] sm:$0xff]
        %v1456 = vld [vmem:[%s435 + $0x78] sm:$0xff]
        %v1457 = vld [vmem:[%s435 + $0x80] sm:$0xff]
        %v1458 = vld [vmem:[%s435 + $0x90] sm:$0xff]
        %v1459 = vld [vmem:[%s435 + $0x98] sm:$0xff]
        %v1460 = vld [vmem:[%s435 + $0xa8] sm:$0xff]
        %v1461 = vld [vmem:[%s435 + $0xb0] sm:$0xff]
        %v1462 = vld [vmem:[%s435 + $0x1] sm:$0xff]
        %v1463 = vld [vmem:[%s435 + $0x9] sm:$0xff]
        %v1464 = vld [vmem:[%s435 + $0x19] sm:$0xff]
        %v1465 = vld [vmem:[%s435 + $0x21] sm:$0xff]
        %v1466 = vld [vmem:[%s435 + $0x31] sm:$0xff]
        %v1467 = vld [vmem:[%s435 + $0x39] sm:$0xff]
        %v1468 = vld [vmem:[%s435 + $0x49] sm:$0xff]
        %v1469 = vld [vmem:[%s435 + $0x51] sm:$0xff]
        %v1470 = vld [vmem:[%s435 + $0x61] sm:$0xff]
        %v1471 = vld [vmem:[%s435 + $0x69] sm:$0xff]
        %v1472 = vld [vmem:[%s435 + $0x79] sm:$0xff]
        %v1473 = vld [vmem:[%s435 + $0x81] sm:$0xff]
        %v1474 = vld [vmem:[%s435 + $0x91] sm:$0xff]
        %v1475 = vld [vmem:[%s435 + $0x99] sm:$0xff]
        %v1476 = vld [vmem:[%s435 + $0xa9] sm:$0xff]
        %v1477 = vld [vmem:[%s435 + $0xb1] sm:$0xff]
        %s1478 = scalar_lea.vmem [#allocation2], 48
        %v1479 = vld [vmem:[%s1478] sm:$0xff]
        %v1480 = vld [vmem:[%s1478 + $0x8] sm:$0xff]
        %v1481 = vld [vmem:[%s1478 + $0x18] sm:$0xff]
        %v1482 = vld [vmem:[%s1478 + $0x20] sm:$0xff]
        %v1483 = vld [vmem:[%s1478 + $0x30] sm:$0xff]
        %v1484 = vld [vmem:[%s1478 + $0x38] sm:$0xff]
        %v1485 = vld [vmem:[%s1478 + $0x48] sm:$0xff]
        %v1486 = vld [vmem:[%s1478 + $0x50] sm:$0xff]
        %v1487 = vld [vmem:[%s1478 + $0x60] sm:$0xff]
        %v1488 = vld [vmem:[%s1478 + $0x68] sm:$0xff]
        %v1489 = vld [vmem:[%s1478 + $0x78] sm:$0xff]
        %v1490 = vld [vmem:[%s1478 + $0x80] sm:$0xff]
        %v1491 = vld [vmem:[%s1478 + $0x90] sm:$0xff]
        %v1492 = vld [vmem:[%s1478 + $0x98] sm:$0xff]
        %v1493 = vld [vmem:[%s1478 + $0xa8] sm:$0xff]
        %v1494 = vld [vmem:[%s1478 + $0xb0] sm:$0xff]
        %v1495 = vld [vmem:[%s1478 + $0x1] sm:$0xff]
        %v1496 = vld [vmem:[%s1478 + $0x9] sm:$0xff]
        %v1497 = vld [vmem:[%s1478 + $0x19] sm:$0xff]
        %v1498 = vld [vmem:[%s1478 + $0x21] sm:$0xff]
        %v1499 = vld [vmem:[%s1478 + $0x31] sm:$0xff]
        %v1500 = vld [vmem:[%s1478 + $0x39] sm:$0xff]
        %v1501 = vld [vmem:[%s1478 + $0x49] sm:$0xff]
        %v1502 = vld [vmem:[%s1478 + $0x51] sm:$0xff]
        %v1503 = vld [vmem:[%s1478 + $0x61] sm:$0xff]
        %v1504 = vld [vmem:[%s1478 + $0x69] sm:$0xff]
        %v1505 = vld [vmem:[%s1478 + $0x79] sm:$0xff]
        %v1506 = vld [vmem:[%s1478 + $0x81] sm:$0xff]
        %v1507 = vld [vmem:[%s1478 + $0x91] sm:$0xff]
        %v1508 = vld [vmem:[%s1478 + $0x99] sm:$0xff]
        %v1509 = vld [vmem:[%s1478 + $0xa9] sm:$0xff]
        %v1510 = vld [vmem:[%s1478 + $0xb1] sm:$0xff]
        %1527 = vrot.lane.b32.xlu0 %v1462, 4
        %v1528 = vpop.permute.xlu0 %1527
        %1529 = vrot.lane.b32.xlu0 %v1463, 4
        %v1530 = vpop.permute.xlu0 %1529
        %1531 = vrot.lane.b32.xlu0 %v1464, 4
        %v1532 = vpop.permute.xlu0 %1531
        %1533 = vrot.lane.b32.xlu0 %v1465, 4
        %v1534 = vpop.permute.xlu0 %1533
        %1535 = vrot.lane.b32.xlu0 %v1466, 4
        %v1536 = vpop.permute.xlu0 %1535
        %1537 = vrot.lane.b32.xlu0 %v1467, 4
        %v1538 = vpop.permute.xlu0 %1537
        %1539 = vrot.lane.b32.xlu0 %v1468, 4
        %v1540 = vpop.permute.xlu0 %1539
        %1541 = vrot.lane.b32.xlu0 %v1469, 4
        %v1542 = vpop.permute.xlu0 %1541
        %1543 = vrot.lane.b32.xlu0 %v1470, 4
        %v1544 = vpop.permute.xlu0 %1543
        %1545 = vrot.lane.b32.xlu0 %v1471, 4
        %v1546 = vpop.permute.xlu0 %1545
        %1547 = vrot.lane.b32.xlu0 %v1472, 4
        %v1548 = vpop.permute.xlu0 %1547
        %1549 = vrot.lane.b32.xlu0 %v1473, 4
        %v1550 = vpop.permute.xlu0 %1549
        %1551 = vrot.lane.b32.xlu0 %v1474, 4
        %v1552 = vpop.permute.xlu0 %1551
        %1553 = vrot.lane.b32.xlu0 %v1475, 4
        %v1554 = vpop.permute.xlu0 %1553
        %1555 = vrot.lane.b32.xlu0 %v1476, 4
        %v1556 = vpop.permute.xlu0 %1555
        %1557 = vrot.lane.b32.xlu0 %v1477, 4
        %v1558 = vpop.permute.xlu0 %1557
        %1591 = vrot.lane.b32.xlu0 %v1479, 8
        %v1592 = vpop.permute.xlu0 %1591
        %1593 = vrot.lane.b32.xlu0 %v1480, 8
        %v1594 = vpop.permute.xlu0 %1593
        %1595 = vrot.lane.b32.xlu0 %v1481, 8
        %v1596 = vpop.permute.xlu0 %1595
        %1597 = vrot.lane.b32.xlu0 %v1482, 8
        %v1598 = vpop.permute.xlu0 %1597
        %1599 = vrot.lane.b32.xlu0 %v1483, 8
        %v1600 = vpop.permute.xlu0 %1599
        %1601 = vrot.lane.b32.xlu0 %v1484, 8
        %v1602 = vpop.permute.xlu0 %1601
        %1603 = vrot.lane.b32.xlu0 %v1485, 8
        %v1604 = vpop.permute.xlu0 %1603
        %1605 = vrot.lane.b32.xlu0 %v1486, 8
        %v1606 = vpop.permute.xlu0 %1605
        %1607 = vrot.lane.b32.xlu0 %v1487, 8
        %v1608 = vpop.permute.xlu0 %1607
        %1609 = vrot.lane.b32.xlu0 %v1488, 8
        %v1610 = vpop.permute.xlu0 %1609
        %1611 = vrot.lane.b32.xlu0 %v1489, 8
        %v1612 = vpop.permute.xlu0 %1611
        %1613 = vrot.lane.b32.xlu0 %v1490, 8
        %v1614 = vpop.permute.xlu0 %1613
        %1615 = vrot.lane.b32.xlu0 %v1491, 8
        %v1616 = vpop.permute.xlu0 %1615
        %1617 = vrot.lane.b32.xlu0 %v1492, 8
        %v1618 = vpop.permute.xlu0 %1617
        %1619 = vrot.lane.b32.xlu0 %v1493, 8
        %v1620 = vpop.permute.xlu0 %1619
        %1621 = vrot.lane.b32.xlu0 %v1494, 8
        %v1622 = vpop.permute.xlu0 %1621
        %1655 = vrot.lane.b32.xlu0 %v1495, 12
        %v1656 = vpop.permute.xlu0 %1655
        %1657 = vrot.lane.b32.xlu0 %v1496, 12
        %v1658 = vpop.permute.xlu0 %1657
        %1659 = vrot.lane.b32.xlu0 %v1497, 12
        %v1660 = vpop.permute.xlu0 %1659
        %1661 = vrot.lane.b32.xlu0 %v1498, 12
        %v1662 = vpop.permute.xlu0 %1661
        %1663 = vrot.lane.b32.xlu0 %v1499, 12
        %v1664 = vpop.permute.xlu0 %1663
        %1665 = vrot.lane.b32.xlu0 %v1500, 12
        %v1666 = vpop.permute.xlu0 %1665
        %1667 = vrot.lane.b32.xlu0 %v1501, 12
        %v1668 = vpop.permute.xlu0 %1667
        %1669 = vrot.lane.b32.xlu0 %v1502, 12
        %v1670 = vpop.permute.xlu0 %1669
        %1671 = vrot.lane.b32.xlu0 %v1503, 12
        %v1672 = vpop.permute.xlu0 %1671
        %1673 = vrot.lane.b32.xlu0 %v1504, 12
        %v1674 = vpop.permute.xlu0 %1673
        %1675 = vrot.lane.b32.xlu0 %v1505, 12
        %v1676 = vpop.permute.xlu0 %1675
        %1677 = vrot.lane.b32.xlu0 %v1506, 12
        %v1678 = vpop.permute.xlu0 %1677
        %1679 = vrot.lane.b32.xlu0 %v1507, 12
        %v1680 = vpop.permute.xlu0 %1679
        %1681 = vrot.lane.b32.xlu0 %v1508, 12
        %v1682 = vpop.permute.xlu0 %1681
        %1683 = vrot.lane.b32.xlu0 %v1509, 12
        %v1684 = vpop.permute.xlu0 %1683
        %1685 = vrot.lane.b32.xlu0 %v1510, 12
        %v1686 = vpop.permute.xlu0 %1685
        %v1703 = vsel %vm660, %v1446, %v1528
        %v1704 = vsel %vm660, %v1447, %v1530
        %v1705 = vsel %vm660, %v1448, %v1532
        %v1706 = vsel %vm660, %v1449, %v1534
        %v1707 = vsel %vm660, %v1450, %v1536
        %v1708 = vsel %vm660, %v1451, %v1538
        %v1709 = vsel %vm660, %v1452, %v1540
        %v1710 = vsel %vm660, %v1453, %v1542
        %v1711 = vsel %vm660, %v1454, %v1544
        %v1712 = vsel %vm660, %v1455, %v1546
        %v1713 = vsel %vm660, %v1456, %v1548
        %v1714 = vsel %vm660, %v1457, %v1550
        %v1715 = vsel %vm660, %v1458, %v1552
        %v1716 = vsel %vm660, %v1459, %v1554
        %v1717 = vsel %vm660, %v1460, %v1556
        %v1718 = vsel %vm660, %v1461, %v1558
        %v1719 = vsel %vm677, %v1703, %v1592
        %v1720 = vsel %vm677, %v1704, %v1594
        %v1721 = vsel %vm677, %v1705, %v1596
        %v1722 = vsel %vm677, %v1706, %v1598
        %v1723 = vsel %vm677, %v1707, %v1600
        %v1724 = vsel %vm677, %v1708, %v1602
        %v1725 = vsel %vm677, %v1709, %v1604
        %v1726 = vsel %vm677, %v1710, %v1606
        %v1727 = vsel %vm677, %v1711, %v1608
        %v1728 = vsel %vm677, %v1712, %v1610
        %v1729 = vsel %vm677, %v1713, %v1612
        %v1730 = vsel %vm677, %v1714, %v1614
        %v1731 = vsel %vm677, %v1715, %v1616
        %v1732 = vsel %vm677, %v1716, %v1618
        %v1733 = vsel %vm677, %v1717, %v1620
        %v1734 = vsel %vm677, %v1718, %v1622
        %v1735 = vsel %vm694, %v1719, %v1656
        %v1736 = vsel %vm694, %v1720, %v1658
        %v1737 = vsel %vm694, %v1721, %v1660
        %v1738 = vsel %vm694, %v1722, %v1662
        %v1739 = vsel %vm694, %v1723, %v1664
        %v1740 = vsel %vm694, %v1724, %v1666
        %v1741 = vsel %vm694, %v1725, %v1668
        %v1742 = vsel %vm694, %v1726, %v1670
        %v1743 = vsel %vm694, %v1727, %v1672
        %v1744 = vsel %vm694, %v1728, %v1674
        %v1745 = vsel %vm694, %v1729, %v1676
        %v1746 = vsel %vm694, %v1730, %v1678
        %v1747 = vsel %vm694, %v1731, %v1680
        %v1748 = vsel %vm694, %v1732, %v1682
        %v1749 = vsel %vm694, %v1733, %v1684
        %v1750 = vsel %vm694, %v1734, %v1686
        %s1751 = scalar_lea.vmem [#allocation8], 32
        %v1752 = vld [vmem:[%s1751] sm:$0xff]
        %v1753 = vld [vmem:[%s1751 + $0x8] sm:$0xff]
        %v1755 = vsel %vm719, %v1735, 0
        %v1758 = vsel %vm719, %v1736, 0
        %v1761 = vsel %vm719, %v1737, 0
        %v1764 = vsel %vm719, %v1738, 0
        %v1767 = vsel %vm719, %v1739, 0
        %v1770 = vsel %vm719, %v1740, 0
        %v1773 = vsel %vm719, %v1741, 0
        %v1776 = vsel %vm719, %v1742, 0
        %v1779 = vsel %vm719, %v1743, 0
        %v1782 = vsel %vm719, %v1744, 0
        %v1785 = vsel %vm719, %v1745, 0
        %v1788 = vsel %vm719, %v1746, 0
        %v1791 = vsel %vm719, %v1747, 0
        %v1794 = vsel %vm719, %v1748, 0
        %v1797 = vsel %vm719, %v1749, 0
        %v1800 = vsel %vm719, %v1750, 0
        %1802 = vmatprep.subr.mxu0 0.0
        %1803 = vmatpush1.msra.mxu0 %v1752
        %1804 = vmatprep.subr.mxu0 0.0
        %1805 = vmatpush1.msra.mxu0 %v1753
        %1806 = vmatprep.subr.mxu0 0.0
        %1807 = vmatpush1.msra.mxu0 0.0
        %1808 = vmatprep.subr.mxu0 0.0
        %1809 = vmatpush1.msra.mxu0 0.0
        %1810 = vmatprep.subr.mxu0 0.0
        %1811 = vmatpush1.msra.mxu0 0.0
        %1812 = vmatprep.subr.mxu0 0.0
        %1813 = vmatpush1.msra.mxu0 0.0
        %1814 = vmatprep.subr.mxu0 0.0
        %1815 = vmatpush1.msra.mxu0 0.0
        %1816 = vmatprep.subr.mxu0 0.0
        %1817 = vmatpush1.msra.mxu0 0.0
        %1818 = vmatprep.subr.mxu0 0.0
        %1819 = vmatpush1.msra.mxu0 0.0
        %1820 = vmatprep.subr.mxu0 0.0
        %1821 = vmatpush1.msra.mxu0 0.0
        %1822 = vmatprep.subr.mxu0 0.0
        %1823 = vmatpush1.msra.mxu0 0.0
        %1824 = vmatprep.subr.mxu0 0.0
        %1825 = vmatpush1.msra.mxu0 0.0
        %1826 = vmatprep.subr.mxu0 0.0
        %1827 = vmatpush1.msra.mxu0 0.0
        %1828 = vmatprep.subr.mxu0 0.0
        %1829 = vmatpush1.msra.mxu0 0.0
        %1830 = vmatprep.subr.mxu0 0.0
        %1831 = vmatpush1.msra.mxu0 0.0
        %1832 = vmatprep.subr.mxu0 0.0
        %1833 = vmatpush1.msra.mxu0 0.0
        %1834 = vmatprep.subr.mxu0 0.0
        %1835 = vmatpush1.msra.mxu0 0.0
        %1836 = vmatprep.subr.mxu0 0.0
        %1837 = vmatpush1.msra.mxu0 0.0
        %1838 = vmatprep.subr.mxu0 0.0
        %1839 = vmatpush1.msra.mxu0 0.0
        %1840 = vmatprep.subr.mxu0 0.0
        %1841 = vmatpush1.msra.mxu0 0.0
        %1842 = vmatprep.subr.mxu0 0.0
        %1843 = vmatpush1.msra.mxu0 0.0
        %1844 = vmatprep.subr.mxu0 0.0
        %1845 = vmatpush1.msra.mxu0 0.0
        %1846 = vmatprep.subr.mxu0 0.0
        %1847 = vmatpush1.msra.mxu0 0.0
        %1848 = vmatprep.subr.mxu0 0.0
        %1849 = vmatpush1.msra.mxu0 0.0
        %1850 = vmatprep.subr.mxu0 0.0
        %1851 = vmatpush1.msra.mxu0 0.0
        %1852 = vmatprep.subr.mxu0 0.0
        %1853 = vmatpush1.msra.mxu0 0.0
        %1854 = vmatprep.subr.mxu0 0.0
        %1855 = vmatpush1.msra.mxu0 0.0
        %1856 = vmatprep.subr.mxu0 0.0
        %1857 = vmatpush1.msra.mxu0 0.0
        %1858 = vmatprep.subr.mxu0 0.0
        %1859 = vmatpush1.msra.mxu0 0.0
        %1860 = vmatprep.subr.mxu0 0.0
        %1861 = vmatpush1.msra.mxu0 0.0
        %1862 = vmatprep.subr.mxu0 0.0
        %1863 = vmatpush1.msra.mxu0 0.0
        %1864 = vmatprep.subr.mxu0 0.0
        %1865 = vmatpush1.msra.mxu0 0.0
        %1866 = vmatprep.mubr.f32.mxu0 0.0
        %1867 = vmatmul.mubr.f32.gmra.mrb[0].mxu0 %v1755
        %v1868 = vpop.f32.mrb[0].mxu0
        %v1869 = vadd.f32 %v717, %v1868
        %v1870 = vpop.f32.mrb[0].mxu0
        %1871 = vmatprep.mubr.f32.mxu0 0.0
        %1872 = vmatmul.mubr.f32.gmra.mrb[0].mxu0 %v1758
        %v1873 = vpop.f32.mrb[0].mxu0
        %v1874 = vadd.f32 %v717, %v1873
        %v1875 = vpop.f32.mrb[0].mxu0
        %1876 = vmatprep.mubr.f32.mxu0 0.0
        %1877 = vmatmul.mubr.f32.gmra.mrb[0].mxu0 %v1761
        %v1878 = vpop.f32.mrb[0].mxu0
        %v1879 = vadd.f32 %v717, %v1878
        %v1880 = vpop.f32.mrb[0].mxu0
        %1881 = vmatprep.mubr.f32.mxu0 0.0
        %1882 = vmatmul.mubr.f32.gmra.mrb[0].mxu0 %v1764
        %v1883 = vpop.f32.mrb[0].mxu0
        %v1884 = vadd.f32 %v717, %v1883
        %v1885 = vpop.f32.mrb[0].mxu0
        %1886 = vmatprep.mubr.f32.mxu0 0.0
        %1887 = vmatmul.mubr.f32.gmra.mrb[0].mxu0 %v1767
        %v1888 = vpop.f32.mrb[0].mxu0
        %v1889 = vadd.f32 %v717, %v1888
        %v1890 = vpop.f32.mrb[0].mxu0
        %1891 = vmatprep.mubr.f32.mxu0 0.0
        %1892 = vmatmul.mubr.f32.gmra.mrb[0].mxu0 %v1770
        %v1893 = vpop.f32.mrb[0].mxu0
        %v1894 = vadd.f32 %v717, %v1893
        %v1895 = vpop.f32.mrb[0].mxu0
        %1896 = vmatprep.mubr.f32.mxu0 0.0
        %1897 = vmatmul.mubr.f32.gmra.mrb[0].mxu0 %v1773
        %v1898 = vpop.f32.mrb[0].mxu0
        %v1899 = vadd.f32 %v717, %v1898
        %v1900 = vpop.f32.mrb[0].mxu0
        %1901 = vmatprep.mubr.f32.mxu0 0.0
        %1902 = vmatmul.mubr.f32.gmra.mrb[0].mxu0 %v1776
        %v1903 = vpop.f32.mrb[0].mxu0
        %v1904 = vadd.f32 %v717, %v1903
        %v1905 = vpop.f32.mrb[0].mxu0
        %1906 = vmatprep.mubr.f32.mxu0 0.0
        %1907 = vmatmul.mubr.f32.gmra.mrb[0].mxu0 %v1779
        %v1908 = vpop.f32.mrb[0].mxu0
        %v1909 = vadd.f32 %v717, %v1908
        %v1910 = vpop.f32.mrb[0].mxu0
        %1911 = vmatprep.mubr.f32.mxu0 0.0
        %1912 = vmatmul.mubr.f32.gmra.mrb[0].mxu0 %v1782
        %v1913 = vpop.f32.mrb[0].mxu0
        %v1914 = vadd.f32 %v717, %v1913
        %v1915 = vpop.f32.mrb[0].mxu0
        %1916 = vmatprep.mubr.f32.mxu0 0.0
        %1917 = vmatmul.mubr.f32.gmra.mrb[0].mxu0 %v1785
        %v1918 = vpop.f32.mrb[0].mxu0
        %v1919 = vadd.f32 %v717, %v1918
        %v1920 = vpop.f32.mrb[0].mxu0
        %1921 = vmatprep.mubr.f32.mxu0 0.0
        %1922 = vmatmul.mubr.f32.gmra.mrb[0].mxu0 %v1788
        %v1923 = vpop.f32.mrb[0].mxu0
        %v1924 = vadd.f32 %v717, %v1923
        %v1925 = vpop.f32.mrb[0].mxu0
        %1926 = vmatprep.mubr.f32.mxu0 0.0
        %1927 = vmatmul.mubr.f32.gmra.mrb[0].mxu0 %v1791
        %v1928 = vpop.f32.mrb[0].mxu0
        %v1929 = vadd.f32 %v717, %v1928
        %v1930 = vpop.f32.mrb[0].mxu0
        %1931 = vmatprep.mubr.f32.mxu0 0.0
        %1932 = vmatmul.mubr.f32.gmra.mrb[0].mxu0 %v1794
        %v1933 = vpop.f32.mrb[0].mxu0
        %v1934 = vadd.f32 %v717, %v1933
        %v1935 = vpop.f32.mrb[0].mxu0
        %1936 = vmatprep.mubr.f32.mxu0 0.0
        %1937 = vmatmul.mubr.f32.gmra.mrb[0].mxu0 %v1797
        %v1938 = vpop.f32.mrb[0].mxu0
        %v1939 = vadd.f32 %v717, %v1938
        %v1940 = vpop.f32.mrb[0].mxu0
        %1941 = vmatprep.mubr.f32.mxu0 0.0
        %1942 = vmatmul.mubr.f32.gmra.mrb[0].mxu0 %v1800
        %v1943 = vpop.f32.mrb[0].mxu0
        %v1944 = vadd.f32 %v717, %v1943
        %v1945 = vpop.f32.mrb[0].mxu0
        %1946 = vdwg.mxu0
        %s1947 = scalar_lea.vmem %s329, 256 [#allocation11]
        %1948 = vst.msk [vmem:[%s1947] sm:$0xff] %vm677, %v1869
        %1949 = vst.msk [vmem:[%s1947 + $0x8] sm:$0xff] %vm677, %v1874
        %1950 = vst.msk [vmem:[%s1947 + $0x10] sm:$0xff] %vm677, %v1879
        %1951 = vst.msk [vmem:[%s1947 + $0x18] sm:$0xff] %vm677, %v1884
        %1952 = vst.msk [vmem:[%s1947 + $0x20] sm:$0xff] %vm677, %v1889
        %1953 = vst.msk [vmem:[%s1947 + $0x28] sm:$0xff] %vm677, %v1894
        %1954 = vst.msk [vmem:[%s1947 + $0x30] sm:$0xff] %vm677, %v1899
        %1955 = vst.msk [vmem:[%s1947 + $0x38] sm:$0xff] %vm677, %v1904
        %1956 = vst.msk [vmem:[%s1947 + $0x40] sm:$0xff] %vm677, %v1909
        %1957 = vst.msk [vmem:[%s1947 + $0x48] sm:$0xff] %vm677, %v1914
        %1958 = vst.msk [vmem:[%s1947 + $0x50] sm:$0xff] %vm677, %v1919
        %1959 = vst.msk [vmem:[%s1947 + $0x58] sm:$0xff] %vm677, %v1924
        %1960 = vst.msk [vmem:[%s1947 + $0x60] sm:$0xff] %vm677, %v1929
        %1961 = vst.msk [vmem:[%s1947 + $0x68] sm:$0xff] %vm677, %v1934
        %1962 = vst.msk [vmem:[%s1947 + $0x70] sm:$0xff] %vm677, %v1939
        %1963 = vst.msk [vmem:[%s1947 + $0x78] sm:$0xff] %vm677, %v1944
        %v1964 = vld [vmem:[%s435 + $0x1] sm:$0xff]
        %v1965 = vld [vmem:[%s435 + $0x9] sm:$0xff]
        %v1966 = vld [vmem:[%s435 + $0x19] sm:$0xff]
        %v1967 = vld [vmem:[%s435 + $0x21] sm:$0xff]
        %v1968 = vld [vmem:[%s435 + $0x31] sm:$0xff]
        %v1969 = vld [vmem:[%s435 + $0x39] sm:$0xff]
        %v1970 = vld [vmem:[%s435 + $0x49] sm:$0xff]
        %v1971 = vld [vmem:[%s435 + $0x51] sm:$0xff]
        %v1972 = vld [vmem:[%s435 + $0x61] sm:$0xff]
        %v1973 = vld [vmem:[%s435 + $0x69] sm:$0xff]
        %v1974 = vld [vmem:[%s435 + $0x79] sm:$0xff]
        %v1975 = vld [vmem:[%s435 + $0x81] sm:$0xff]
        %v1976 = vld [vmem:[%s435 + $0x91] sm:$0xff]
        %v1977 = vld [vmem:[%s435 + $0x99] sm:$0xff]
        %v1978 = vld [vmem:[%s435 + $0xa9] sm:$0xff]
        %v1979 = vld [vmem:[%s435 + $0xb1] sm:$0xff]
        %v1980 = vld [vmem:[%s435 + $0x2] sm:$0xff]
        %v1981 = vld [vmem:[%s435 + $0xa] sm:$0xff]
        %v1982 = vld [vmem:[%s435 + $0x1a] sm:$0xff]
        %v1983 = vld [vmem:[%s435 + $0x22] sm:$0xff]
        %v1984 = vld [vmem:[%s435 + $0x32] sm:$0xff]
        %v1985 = vld [vmem:[%s435 + $0x3a] sm:$0xff]
        %v1986 = vld [vmem:[%s435 + $0x4a] sm:$0xff]
        %v1987 = vld [vmem:[%s435 + $0x52] sm:$0xff]
        %v1988 = vld [vmem:[%s435 + $0x62] sm:$0xff]
        %v1989 = vld [vmem:[%s435 + $0x6a] sm:$0xff]
        %v1990 = vld [vmem:[%s435 + $0x7a] sm:$0xff]
        %v1991 = vld [vmem:[%s435 + $0x82] sm:$0xff]
        %v1992 = vld [vmem:[%s435 + $0x92] sm:$0xff]
        %v1993 = vld [vmem:[%s435 + $0x9a] sm:$0xff]
        %v1994 = vld [vmem:[%s435 + $0xaa] sm:$0xff]
        %v1995 = vld [vmem:[%s435 + $0xb2] sm:$0xff]
        %v1996 = vld [vmem:[%s1478 + $0x1] sm:$0xff]
        %v1997 = vld [vmem:[%s1478 + $0x9] sm:$0xff]
        %v1998 = vld [vmem:[%s1478 + $0x19] sm:$0xff]
        %v1999 = vld [vmem:[%s1478 + $0x21] sm:$0xff]
        %v2000 = vld [vmem:[%s1478 + $0x31] sm:$0xff]
        %v2001 = vld [vmem:[%s1478 + $0x39] sm:$0xff]
        %v2002 = vld [vmem:[%s1478 + $0x49] sm:$0xff]
        %v2003 = vld [vmem:[%s1478 + $0x51] sm:$0xff]
        %v2004 = vld [vmem:[%s1478 + $0x61] sm:$0xff]
        %v2005 = vld [vmem:[%s1478 + $0x69] sm:$0xff]
        %v2006 = vld [vmem:[%s1478 + $0x79] sm:$0xff]
        %v2007 = vld [vmem:[%s1478 + $0x81] sm:$0xff]
        %v2008 = vld [vmem:[%s1478 + $0x91] sm:$0xff]
        %v2009 = vld [vmem:[%s1478 + $0x99] sm:$0xff]
        %v2010 = vld [vmem:[%s1478 + $0xa9] sm:$0xff]
        %v2011 = vld [vmem:[%s1478 + $0xb1] sm:$0xff]
        %v2012 = vld [vmem:[%s1478 + $0x2] sm:$0xff]
        %v2013 = vld [vmem:[%s1478 + $0xa] sm:$0xff]
        %v2014 = vld [vmem:[%s1478 + $0x1a] sm:$0xff]
        %v2015 = vld [vmem:[%s1478 + $0x22] sm:$0xff]
        %v2016 = vld [vmem:[%s1478 + $0x32] sm:$0xff]
        %v2017 = vld [vmem:[%s1478 + $0x3a] sm:$0xff]
        %v2018 = vld [vmem:[%s1478 + $0x4a] sm:$0xff]
        %v2019 = vld [vmem:[%s1478 + $0x52] sm:$0xff]
        %v2020 = vld [vmem:[%s1478 + $0x62] sm:$0xff]
        %v2021 = vld [vmem:[%s1478 + $0x6a] sm:$0xff]
        %v2022 = vld [vmem:[%s1478 + $0x7a] sm:$0xff]
        %v2023 = vld [vmem:[%s1478 + $0x82] sm:$0xff]
        %v2024 = vld [vmem:[%s1478 + $0x92] sm:$0xff]
        %v2025 = vld [vmem:[%s1478 + $0x9a] sm:$0xff]
        %v2026 = vld [vmem:[%s1478 + $0xaa] sm:$0xff]
        %v2027 = vld [vmem:[%s1478 + $0xb2] sm:$0xff]
        %2044 = vrot.lane.b32.xlu0 %v1980, 4
        %v2045 = vpop.permute.xlu0 %2044
        %2046 = vrot.lane.b32.xlu0 %v1981, 4
        %v2047 = vpop.permute.xlu0 %2046
        %2048 = vrot.lane.b32.xlu0 %v1982, 4
        %v2049 = vpop.permute.xlu0 %2048
        %2050 = vrot.lane.b32.xlu0 %v1983, 4
        %v2051 = vpop.permute.xlu0 %2050
        %2052 = vrot.lane.b32.xlu0 %v1984, 4
        %v2053 = vpop.permute.xlu0 %2052
        %2054 = vrot.lane.b32.xlu0 %v1985, 4
        %v2055 = vpop.permute.xlu0 %2054
        %2056 = vrot.lane.b32.xlu0 %v1986, 4
        %v2057 = vpop.permute.xlu0 %2056
        %2058 = vrot.lane.b32.xlu0 %v1987, 4
        %v2059 = vpop.permute.xlu0 %2058
        %2060 = vrot.lane.b32.xlu0 %v1988, 4
        %v2061 = vpop.permute.xlu0 %2060
        %2062 = vrot.lane.b32.xlu0 %v1989, 4
        %v2063 = vpop.permute.xlu0 %2062
        %2064 = vrot.lane.b32.xlu0 %v1990, 4
        %v2065 = vpop.permute.xlu0 %2064
        %2066 = vrot.lane.b32.xlu0 %v1991, 4
        %v2067 = vpop.permute.xlu0 %2066
        %2068 = vrot.lane.b32.xlu0 %v1992, 4
        %v2069 = vpop.permute.xlu0 %2068
        %2070 = vrot.lane.b32.xlu0 %v1993, 4
        %v2071 = vpop.permute.xlu0 %2070
        %2072 = vrot.lane.b32.xlu0 %v1994, 4
        %v2073 = vpop.permute.xlu0 %2072
        %2074 = vrot.lane.b32.xlu0 %v1995, 4
        %v2075 = vpop.permute.xlu0 %2074
        %2108 = vrot.lane.b32.xlu0 %v1996, 8
        %v2109 = vpop.permute.xlu0 %2108
        %2110 = vrot.lane.b32.xlu0 %v1997, 8
        %v2111 = vpop.permute.xlu0 %2110
        %2112 = vrot.lane.b32.xlu0 %v1998, 8
        %v2113 = vpop.permute.xlu0 %2112
        %2114 = vrot.lane.b32.xlu0 %v1999, 8
        %v2115 = vpop.permute.xlu0 %2114
        %2116 = vrot.lane.b32.xlu0 %v2000, 8
        %v2117 = vpop.permute.xlu0 %2116
        %2118 = vrot.lane.b32.xlu0 %v2001, 8
        %v2119 = vpop.permute.xlu0 %2118
        %2120 = vrot.lane.b32.xlu0 %v2002, 8
        %v2121 = vpop.permute.xlu0 %2120
        %2122 = vrot.lane.b32.xlu0 %v2003, 8
        %v2123 = vpop.permute.xlu0 %2122
        %2124 = vrot.lane.b32.xlu0 %v2004, 8
        %v2125 = vpop.permute.xlu0 %2124
        %2126 = vrot.lane.b32.xlu0 %v2005, 8
        %v2127 = vpop.permute.xlu0 %2126
        %2128 = vrot.lane.b32.xlu0 %v2006, 8
        %v2129 = vpop.permute.xlu0 %2128
        %2130 = vrot.lane.b32.xlu0 %v2007, 8
        %v2131 = vpop.permute.xlu0 %2130
        %2132 = vrot.lane.b32.xlu0 %v2008, 8
        %v2133 = vpop.permute.xlu0 %2132
        %2134 = vrot.lane.b32.xlu0 %v2009, 8
        %v2135 = vpop.permute.xlu0 %2134
        %2136 = vrot.lane.b32.xlu0 %v2010, 8
        %v2137 = vpop.permute.xlu0 %2136
        %2138 = vrot.lane.b32.xlu0 %v2011, 8
        %v2139 = vpop.permute.xlu0 %2138
        %2172 = vrot.lane.b32.xlu0 %v2012, 12
        %v2173 = vpop.permute.xlu0 %2172
        %2174 = vrot.lane.b32.xlu0 %v2013, 12
        %v2175 = vpop.permute.xlu0 %2174
        %2176 = vrot.lane.b32.xlu0 %v2014, 12
        %v2177 = vpop.permute.xlu0 %2176
        %2178 = vrot.lane.b32.xlu0 %v2015, 12
        %v2179 = vpop.permute.xlu0 %2178
        %2180 = vrot.lane.b32.xlu0 %v2016, 12
        %v2181 = vpop.permute.xlu0 %2180
        %2182 = vrot.lane.b32.xlu0 %v2017, 12
        %v2183 = vpop.permute.xlu0 %2182
        %2184 = vrot.lane.b32.xlu0 %v2018, 12
        %v2185 = vpop.permute.xlu0 %2184
        %2186 = vrot.lane.b32.xlu0 %v2019, 12
        %v2187 = vpop.permute.xlu0 %2186
        %2188 = vrot.lane.b32.xlu0 %v2020, 12
        %v2189 = vpop.permute.xlu0 %2188
        %2190 = vrot.lane.b32.xlu0 %v2021, 12
        %v2191 = vpop.permute.xlu0 %2190
        %2192 = vrot.lane.b32.xlu0 %v2022, 12
        %v2193 = vpop.permute.xlu0 %2192
        %2194 = vrot.lane.b32.xlu0 %v2023, 12
        %v2195 = vpop.permute.xlu0 %2194
        %2196 = vrot.lane.b32.xlu0 %v2024, 12
        %v2197 = vpop.permute.xlu0 %2196
        %2198 = vrot.lane.b32.xlu0 %v2025, 12
        %v2199 = vpop.permute.xlu0 %2198
        %2200 = vrot.lane.b32.xlu0 %v2026, 12
        %v2201 = vpop.permute.xlu0 %2200
        %2202 = vrot.lane.b32.xlu0 %v2027, 12
        %v2203 = vpop.permute.xlu0 %2202
        %v2220 = vsel %vm660, %v1964, %v2045
        %v2221 = vsel %vm660, %v1965, %v2047
        %v2222 = vsel %vm660, %v1966, %v2049
        %v2223 = vsel %vm660, %v1967, %v2051
        %v2224 = vsel %vm660, %v1968, %v2053
        %v2225 = vsel %vm660, %v1969, %v2055
        %v2226 = vsel %vm660, %v1970, %v2057
        %v2227 = vsel %vm660, %v1971, %v2059
        %v2228 = vsel %vm660, %v1972, %v2061
        %v2229 = vsel %vm660, %v1973, %v2063
        %v2230 = vsel %vm660, %v1974, %v2065
        %v2231 = vsel %vm660, %v1975, %v2067
        %v2232 = vsel %vm660, %v1976, %v2069
        %v2233 = vsel %vm660, %v1977, %v2071
        %v2234 = vsel %vm660, %v1978, %v2073
        %v2235 = vsel %vm660, %v1979, %v2075
        %v2236 = vsel %vm677, %v2220, %v2109
        %v2237 = vsel %vm677, %v2221, %v2111
        %v2238 = vsel %vm677, %v2222, %v2113
        %v2239 = vsel %vm677, %v2223, %v2115
        %v2240 = vsel %vm677, %v2224, %v2117
        %v2241 = vsel %vm677, %v2225, %v2119
        %v2242 = vsel %vm677, %v2226, %v2121
        %v2243 = vsel %vm677, %v2227, %v2123
        %v2244 = vsel %vm677, %v2228, %v2125
        %v2245 = vsel %vm677, %v2229, %v2127
        %v2246 = vsel %vm677, %v2230, %v2129
        %v2247 = vsel %vm677, %v2231, %v2131
        %v2248 = vsel %vm677, %v2232, %v2133
        %v2249 = vsel %vm677, %v2233, %v2135
        %v2250 = vsel %vm677, %v2234, %v2137
        %v2251 = vsel %vm677, %v2235, %v2139
        %v2252 = vsel %vm694, %v2236, %v2173
        %v2253 = vsel %vm694, %v2237, %v2175
        %v2254 = vsel %vm694, %v2238, %v2177
        %v2255 = vsel %vm694, %v2239, %v2179
        %v2256 = vsel %vm694, %v2240, %v2181
        %v2257 = vsel %vm694, %v2241, %v2183
        %v2258 = vsel %vm694, %v2242, %v2185
        %v2259 = vsel %vm694, %v2243, %v2187
        %v2260 = vsel %vm694, %v2244, %v2189
        %v2261 = vsel %vm694, %v2245, %v2191
        %v2262 = vsel %vm694, %v2246, %v2193
        %v2263 = vsel %vm694, %v2247, %v2195
        %v2264 = vsel %vm694, %v2248, %v2197
        %v2265 = vsel %vm694, %v2249, %v2199
        %v2266 = vsel %vm694, %v2250, %v2201
        %v2267 = vsel %vm694, %v2251, %v2203
        %s2268 = scalar_lea.vmem [#allocation8], 48
        %v2269 = vld [vmem:[%s2268] sm:$0xff]
        %v2270 = vld [vmem:[%s2268 + $0x8] sm:$0xff]
        %v2272 = vsel %vm719, %v2252, 0
        %v2275 = vsel %vm719, %v2253, 0
        %v2278 = vsel %vm719, %v2254, 0
        %v2281 = vsel %vm719, %v2255, 0
        %v2284 = vsel %vm719, %v2256, 0
        %v2287 = vsel %vm719, %v2257, 0
        %v2290 = vsel %vm719, %v2258, 0
        %v2293 = vsel %vm719, %v2259, 0
        %v2296 = vsel %vm719, %v2260, 0
        %v2299 = vsel %vm719, %v2261, 0
        %v2302 = vsel %vm719, %v2262, 0
        %v2305 = vsel %vm719, %v2263, 0
        %v2308 = vsel %vm719, %v2264, 0
        %v2311 = vsel %vm719, %v2265, 0
        %v2314 = vsel %vm719, %v2266, 0
        %v2317 = vsel %vm719, %v2267, 0
        %2319 = vmatprep.subr.mxu0 0.0
        %2320 = vmatpush1.msra.mxu0 %v2269
        %2321 = vmatprep.subr.mxu0 0.0
        %2322 = vmatpush1.msra.mxu0 %v2270
        %2323 = vmatprep.subr.mxu0 0.0
        %2324 = vmatpush1.msra.mxu0 0.0
        %2325 = vmatprep.subr.mxu0 0.0
        %2326 = vmatpush1.msra.mxu0 0.0
        %2327 = vmatprep.subr.mxu0 0.0
        %2328 = vmatpush1.msra.mxu0 0.0
        %2329 = vmatprep.subr.mxu0 0.0
        %2330 = vmatpush1.msra.mxu0 0.0
        %2331 = vmatprep.subr.mxu0 0.0
        %2332 = vmatpush1.msra.mxu0 0.0
        %2333 = vmatprep.subr.mxu0 0.0
        %2334 = vmatpush1.msra.mxu0 0.0
        %2335 = vmatprep.subr.mxu0 0.0
        %2336 = vmatpush1.msra.mxu0 0.0
        %2337 = vmatprep.subr.mxu0 0.0
        %2338 = vmatpush1.msra.mxu0 0.0
        %2339 = vmatprep.subr.mxu0 0.0
        %2340 = vmatpush1.msra.mxu0 0.0
        %2341 = vmatprep.subr.mxu0 0.0
        %2342 = vmatpush1.msra.mxu0 0.0
        %2343 = vmatprep.subr.mxu0 0.0
        %2344 = vmatpush1.msra.mxu0 0.0
        %2345 = vmatprep.subr.mxu0 0.0
        %2346 = vmatpush1.msra.mxu0 0.0
        %2347 = vmatprep.subr.mxu0 0.0
        %2348 = vmatpush1.msra.mxu0 0.0
        %2349 = vmatprep.subr.mxu0 0.0
        %2350 = vmatpush1.msra.mxu0 0.0
        %2351 = vmatprep.subr.mxu0 0.0
        %2352 = vmatpush1.msra.mxu0 0.0
        %2353 = vmatprep.subr.mxu0 0.0
        %2354 = vmatpush1.msra.mxu0 0.0
        %2355 = vmatprep.subr.mxu0 0.0
        %2356 = vmatpush1.msra.mxu0 0.0
        %2357 = vmatprep.subr.mxu0 0.0
        %2358 = vmatpush1.msra.mxu0 0.0
        %2359 = vmatprep.subr.mxu0 0.0
        %2360 = vmatpush1.msra.mxu0 0.0
        %2361 = vmatprep.subr.mxu0 0.0
        %2362 = vmatpush1.msra.mxu0 0.0
        %2363 = vmatprep.subr.mxu0 0.0
        %2364 = vmatpush1.msra.mxu0 0.0
        %2365 = vmatprep.subr.mxu0 0.0
        %2366 = vmatpush1.msra.mxu0 0.0
        %2367 = vmatprep.subr.mxu0 0.0
        %2368 = vmatpush1.msra.mxu0 0.0
        %2369 = vmatprep.subr.mxu0 0.0
        %2370 = vmatpush1.msra.mxu0 0.0
        %2371 = vmatprep.subr.mxu0 0.0
        %2372 = vmatpush1.msra.mxu0 0.0
        %2373 = vmatprep.subr.mxu0 0.0
        %2374 = vmatpush1.msra.mxu0 0.0
        %2375 = vmatprep.subr.mxu0 0.0
        %2376 = vmatpush1.msra.mxu0 0.0
        %2377 = vmatprep.subr.mxu0 0.0
        %2378 = vmatpush1.msra.mxu0 0.0
        %2379 = vmatprep.subr.mxu0 0.0
        %2380 = vmatpush1.msra.mxu0 0.0
        %2381 = vmatprep.subr.mxu0 0.0
        %2382 = vmatpush1.msra.mxu0 0.0
        %2383 = vmatprep.mubr.f32.mxu0 0.0
        %2384 = vmatmul.mubr.f32.gmra.mrb[0].mxu0 %v2272
        %v2385 = vpop.f32.mrb[0].mxu0
        %v2386 = vadd.f32 %v717, %v2385
        %v2387 = vpop.f32.mrb[0].mxu0
        %2388 = vmatprep.mubr.f32.mxu0 0.0
        %2389 = vmatmul.mubr.f32.gmra.mrb[0].mxu0 %v2275
        %v2390 = vpop.f32.mrb[0].mxu0
        %v2391 = vadd.f32 %v717, %v2390
        %v2392 = vpop.f32.mrb[0].mxu0
        %2393 = vmatprep.mubr.f32.mxu0 0.0
        %2394 = vmatmul.mubr.f32.gmra.mrb[0].mxu0 %v2278
        %v2395 = vpop.f32.mrb[0].mxu0
        %v2396 = vadd.f32 %v717, %v2395
        %v2397 = vpop.f32.mrb[0].mxu0
        %2398 = vmatprep.mubr.f32.mxu0 0.0
        %2399 = vmatmul.mubr.f32.gmra.mrb[0].mxu0 %v2281
        %v2400 = vpop.f32.mrb[0].mxu0
        %v2401 = vadd.f32 %v717, %v2400
        %v2402 = vpop.f32.mrb[0].mxu0
        %2403 = vmatprep.mubr.f32.mxu0 0.0
        %2404 = vmatmul.mubr.f32.gmra.mrb[0].mxu0 %v2284
        %v2405 = vpop.f32.mrb[0].mxu0
        %v2406 = vadd.f32 %v717, %v2405
        %v2407 = vpop.f32.mrb[0].mxu0
        %2408 = vmatprep.mubr.f32.mxu0 0.0
        %2409 = vmatmul.mubr.f32.gmra.mrb[0].mxu0 %v2287
        %v2410 = vpop.f32.mrb[0].mxu0
        %v2411 = vadd.f32 %v717, %v2410
        %v2412 = vpop.f32.mrb[0].mxu0
        %2413 = vmatprep.mubr.f32.mxu0 0.0
        %2414 = vmatmul.mubr.f32.gmra.mrb[0].mxu0 %v2290
        %v2415 = vpop.f32.mrb[0].mxu0
        %v2416 = vadd.f32 %v717, %v2415
        %v2417 = vpop.f32.mrb[0].mxu0
        %2418 = vmatprep.mubr.f32.mxu0 0.0
        %2419 = vmatmul.mubr.f32.gmra.mrb[0].mxu0 %v2293
        %v2420 = vpop.f32.mrb[0].mxu0
        %v2421 = vadd.f32 %v717, %v2420
        %v2422 = vpop.f32.mrb[0].mxu0
        %2423 = vmatprep.mubr.f32.mxu0 0.0
        %2424 = vmatmul.mubr.f32.gmra.mrb[0].mxu0 %v2296
        %v2425 = vpop.f32.mrb[0].mxu0
        %v2426 = vadd.f32 %v717, %v2425
        %v2427 = vpop.f32.mrb[0].mxu0
        %2428 = vmatprep.mubr.f32.mxu0 0.0
        %2429 = vmatmul.mubr.f32.gmra.mrb[0].mxu0 %v2299
        %v2430 = vpop.f32.mrb[0].mxu0
        %v2431 = vadd.f32 %v717, %v2430
        %v2432 = vpop.f32.mrb[0].mxu0
        %2433 = vmatprep.mubr.f32.mxu0 0.0
        %2434 = vmatmul.mubr.f32.gmra.mrb[0].mxu0 %v2302
        %v2435 = vpop.f32.mrb[0].mxu0
        %v2436 = vadd.f32 %v717, %v2435
        %v2437 = vpop.f32.mrb[0].mxu0
        %2438 = vmatprep.mubr.f32.mxu0 0.0
        %2439 = vmatmul.mubr.f32.gmra.mrb[0].mxu0 %v2305
        %v2440 = vpop.f32.mrb[0].mxu0
        %v2441 = vadd.f32 %v717, %v2440
        %v2442 = vpop.f32.mrb[0].mxu0
        %2443 = vmatprep.mubr.f32.mxu0 0.0
        %2444 = vmatmul.mubr.f32.gmra.mrb[0].mxu0 %v2308
        %v2445 = vpop.f32.mrb[0].mxu0
        %v2446 = vadd.f32 %v717, %v2445
        %v2447 = vpop.f32.mrb[0].mxu0
        %2448 = vmatprep.mubr.f32.mxu0 0.0
        %2449 = vmatmul.mubr.f32.gmra.mrb[0].mxu0 %v2311
        %v2450 = vpop.f32.mrb[0].mxu0
        %v2451 = vadd.f32 %v717, %v2450
        %v2452 = vpop.f32.mrb[0].mxu0
        %2453 = vmatprep.mubr.f32.mxu0 0.0
        %2454 = vmatmul.mubr.f32.gmra.mrb[0].mxu0 %v2314
        %v2455 = vpop.f32.mrb[0].mxu0
        %v2456 = vadd.f32 %v717, %v2455
        %v2457 = vpop.f32.mrb[0].mxu0
        %2458 = vmatprep.mubr.f32.mxu0 0.0
        %2459 = vmatmul.mubr.f32.gmra.mrb[0].mxu0 %v2317
        %v2460 = vpop.f32.mrb[0].mxu0
        %v2461 = vadd.f32 %v717, %v2460
        %v2462 = vpop.f32.mrb[0].mxu0
        %2463 = vdwg.mxu0
        %s2464 = scalar_lea.vmem %s329, 384 [#allocation11]
        %2465 = vst.msk [vmem:[%s2464] sm:$0xff] %vm677, %v2386
        %2466 = vst.msk [vmem:[%s2464 + $0x8] sm:$0xff] %vm677, %v2391
        %2467 = vst.msk [vmem:[%s2464 + $0x10] sm:$0xff] %vm677, %v2396
        %2468 = vst.msk [vmem:[%s2464 + $0x18] sm:$0xff] %vm677, %v2401
        %2469 = vst.msk [vmem:[%s2464 + $0x20] sm:$0xff] %vm677, %v2406
        %2470 = vst.msk [vmem:[%s2464 + $0x28] sm:$0xff] %vm677, %v2411
        %2471 = vst.msk [vmem:[%s2464 + $0x30] sm:$0xff] %vm677, %v2416
        %2472 = vst.msk [vmem:[%s2464 + $0x38] sm:$0xff] %vm677, %v2421
        %2473 = vst.msk [vmem:[%s2464 + $0x40] sm:$0xff] %vm677, %v2426
        %2474 = vst.msk [vmem:[%s2464 + $0x48] sm:$0xff] %vm677, %v2431
        %2475 = vst.msk [vmem:[%s2464 + $0x50] sm:$0xff] %vm677, %v2436
        %2476 = vst.msk [vmem:[%s2464 + $0x58] sm:$0xff] %vm677, %v2441
        %2477 = vst.msk [vmem:[%s2464 + $0x60] sm:$0xff] %vm677, %v2446
        %2478 = vst.msk [vmem:[%s2464 + $0x68] sm:$0xff] %vm677, %v2451
        %2479 = vst.msk [vmem:[%s2464 + $0x70] sm:$0xff] %vm677, %v2456
        %2480 = vst.msk [vmem:[%s2464 + $0x78] sm:$0xff] %vm677, %v2461
        %s2481 = sand.u32 %s164, 1
        %s2482 = scalar_lea.sflag [#allocation5], %s2481
        %s2483 = sand.u32 %s164, 1
        %s2484 = smul.addr %s2483, 512
        %s2485 = scalar_lea.vmem [#allocation11], %s2484
        // Predicated region
        $region57: #{tpu_custom_call.1} parent=35 // pred_check
          %p2486 = pneg %p174
        $region58: #{tpu_custom_call.1} parent=35 // pred_check_branch
          %2488 = sbr.rel (%p2486) target = $region60
        $region59: #{tpu_custom_call.1} parent=35 // pred_region
          #allocation13 [shape = 'u32[6]{0}', space=smem, size = 0x18, scoped, tag = 'DMA stride descriptor']
          %s2489 = smul.u32 16, %s31
          %s2491 = ssub.s32 8192, 8192
          %2492 = vsyncadd %s2482, %s2491
          %s2493 = sadd.s32 %s32, %s2489
          %s2494 = smul.addr %s30, 128
          %s2495 = sadd.s32 %s2493, %s2494
          %s2496 = smul.addr %s2495, 128
          %s2497 = scalar_lea.hbm %s4, %s2496
          %s2499 = sshll.u32 1, 14
          %s2500 = sxor.u32 4294967295, %s2499
          %s2503 = sshll.u32 7, 18
          %s2504 = sxor.u32 4294967295, %s2503
          %s2505 = sand.u32 0, %s2504
          %s2507 = sor.u32 %s2505, 0
          %s2509 = sshll.u32 3, 24
          %s2510 = sxor.u32 4294967295, %s2509
          %s2511 = sand.u32 %s2507, %s2510
          %s2513 = sor.u32 %s2511, 0
          %s2514 = sshll.u32 %s2485, 4
          %s2515 = int_to_ptr.vmem [resolvable:$true] %s2514
          %2521 = sst [smem:[#allocation13]] 2048
          %s2522 = scalar_lea.smem [#allocation13], 1
          %2523 = sst [smem:[%s2522]] 4096
          %s2524 = scalar_lea.smem [#allocation13], 2
          %2525 = sst [smem:[%s2524]] 16
          %s2526 = scalar_lea.smem [#allocation13], 3
          %2527 = sst [smem:[%s2526]] 128
          %s2528 = scalar_lea.smem [#allocation13], 4
          %2529 = sst [smem:[%s2528]] 128
          %s2530 = scalar_lea.smem [#allocation13], 5
          %2531 = sst [smem:[%s2530]] 8
          %2533 = dma.general %s2515, 8192, %s2497, %s2482, [#allocation12], [#allocation13], %s2513, 0
        $region60: #{tpu_custom_call.1} parent=35 // pred_fallthru
          _
      $region36: #{tpu_custom_call.1} parent=5 // pred_fallthru
        _
      %p2534 = scmp.le.s32.totalorder 2, %s20
      // Predicated region
      $region61: #{tpu_custom_call.1} parent=5 // pred_check
        %p2535 = pneg %p2534
      $region62: #{tpu_custom_call.1} parent=5 // pred_check_branch
        %2537 = sbr.rel (%p2535) target = $region64
      $region63: #{tpu_custom_call.1} parent=5 // pred_region
        %s2538 = ssub.s32 %s20, 2
        // Predicated region
        $region65: #{tpu_custom_call.1} parent=63 // pred_check
          %p2539 = pneg %p180
        $region66: #{tpu_custom_call.1} parent=63 // pred_check_branch
          %2541 = sbr.rel (%p2539) target = $region68
        $region67: #{tpu_custom_call.1} parent=63 // pred_region
          %s2542 = sand.u32 %s165, 1
          %s2543 = scalar_lea.sflag [#allocation5], %s2542
          %s2544 = sand.u32 %s165, 1
          %s2545 = smul.addr %s2544, 512
          %s2546 = scalar_lea.vmem [#allocation11], %s2545
          %2547 = dma.done %s2543, 8192
        $region68: #{tpu_custom_call.1} parent=63 // pred_fallthru
          _
      $region64: #{tpu_custom_call.1} parent=5 // pred_fallthru
        _
    $region6: #{tpu_custom_call.1} parent=1 // loop_footer
      %s24 = sadd.s32 1, %s20
    $region7: #{tpu_custom_call.1} parent=1 // loop_footer_branch
      %19 = sbr.rel target = $region3
    $region8: #{tpu_custom_call.1} parent=1 // loop_exit
      _
    %2548 = vsyncpa [#allocation4], 1
    %s2549 = scalar_lea.sflag [#allocation4], 1
    %2550 = vsyncpa %s2549, 1
    %2551 = vsyncpa [#allocation7], 1
    %s2552 = scalar_lea.sflag [#allocation7], 1
    %2553 = vsyncpa %s2552, 1
    %2554 = vsyncpa [#allocation10], 1
    %2555 = vsyncpa [#allocation5], 1
    %s2556 = scalar_lea.sflag [#allocation5], 1
    %2557 = vsyncpa %s2556, 1

</llo_original>
